<compile_context>
chip_gen: v6e
topology: v6e:2x2x1
jax: 0.10.0
libtpu: 0.0.40
codegen_flags: <defaults>
</compile_context>

<pallas_src>
from functools import partial

import jax
import jax.numpy as jnp
from jax.experimental import pallas as pl
from jax.experimental.pallas import tpu as pltpu


_OFF = 128  # lane-tile aligned zero border around the staged flat image


def _floor_div(x, d):
    # Exact floor-divide for small non-negative integer-valued f32 arrays
    # (avoids vector integer div/mod in the kernel).
    return jnp.floor((x + 0.5) * (1.0 / d))


def _encode_block_kernel(x_ref, w_ref, b_ref, g_ref, beta_ref, o_ref,
                         xbuf_ref, patch_ref, cbuf_ref, sum_ref, ssq_ref,
                         *, H, W, k, eps, inv_count):
    n = pl.program_id(0)
    last = pl.num_programs(0) - 1

    Ci = x_ref.shape[1]
    NP = o_ref.shape[1]                    # N * Ho * Wo (lane-dense output width)
    HW = H * W
    Ho, Wo = H // 2, W // 2
    HoWo = Ho * Wo
    pad = (k - 1) // 2                     # Conv2d padding (=1 for k=3)

    # ---- stage this image in a zero-bordered flat buffer (fused padding) ----
    xbuf_ref[...] = jnp.zeros_like(xbuf_ref)
    xbuf_ref[:, _OFF:_OFF + HW] = x_ref[0]                       # aligned store

    # flat index -> (row, col) as exact f32 integers, for the boundary masks
    q = jax.lax.broadcasted_iota(jnp.int32, (1, HW), 1).astype(jnp.float32)
    hh = _floor_div(q, W)
    ww = q - hh * W

    # ---- im2col: k*k lane-shifted windows, boundary masked ------------------
    for kh in range(k):
        for kw in range(k):
            t = kh * k + kw
            shift = (kh - pad) * W + (kw - pad)
            win = xbuf_ref[:, _OFF + shift:_OFF + shift + HW]    # (Ci, HW)
            valid = ((hh >= pad - kh) & (hh <= H - 1 + pad - kh) &
                     (ww >= pad - kw) & (ww <= W - 1 + pad - kw))
            patch_ref[t] = jnp.where(valid, win, 0.0)
    patch = patch_ref[...].reshape(k * k * Ci, HW)     # leading-dim merge only

    # ---- Conv2d: ONE (Co, k*k*Ci) @ (k*k*Ci, H*W) MXU matmul + bias ----------
    conv = jnp.dot(w_ref[...], patch,
                   preferred_element_type=jnp.float32) + b_ref[...]   # (Co, HW)

    # ---- MaxPool2d(2): neighbours via lane-offset reads of a staging buffer --
    cbuf_ref[...] = jnp.zeros_like(cbuf_ref)
    cbuf_ref[:, 0:HW] = conv
    c01 = cbuf_ref[:, 1:1 + HW]                  # (h,   w+1)
    c10 = cbuf_ref[:, W:W + HW]                  # (h+1, w)
    c11 = cbuf_ref[:, W + 1:W + 1 + HW]          # (h+1, w+1)
    m2 = jnp.maximum(jnp.maximum(conv, c01), jnp.maximum(c10, c11))   # (Co, HW)

    # ---- fold "keep even rows/cols" + placement into output lanes
    #      [n*HoWo, (n+1)*HoWo) into one selection matmul ----------------------
    qc = jax.lax.broadcasted_iota(jnp.int32, (HW, 1), 0).astype(jnp.float32)
    oc = jax.lax.broadcasted_iota(jnp.int32, (1, NP), 1).astype(jnp.float32)
    hq = _floor_div(qc, W)
    wq = qc - hq * W
    even = ((hq - 2.0 * _floor_div(hq, 2) == 0.0) &
            (wq - 2.0 * _floor_div(wq, 2) == 0.0))                    # (HW, 1)
    tgt = ((n * HoWo).astype(jnp.float32)
           + _floor_div(hq, 2) * Wo + _floor_div(wq, 2))              # (HW, 1)
    sel = jnp.where(even & (oc == tgt), 1.0, 0.0)                     # (HW, NP)

    act = jnp.maximum(
        jnp.dot(m2, sel, preferred_element_type=jnp.float32), 0.0)    # (Co, NP)

    # ---- single-pass BatchNorm statistics (sum, sum of squares) --------------
    @pl.when(n == 0)
    def _init():
        o_ref[...] = jnp.zeros_like(o_ref)
        sum_ref[...] = jnp.zeros_like(sum_ref)
        ssq_ref[...] = jnp.zeros_like(ssq_ref)

    o_ref[...] = o_ref[...] + act            # disjoint lane ranges per image
    sum_ref[...] = sum_ref[...] + jnp.sum(act, axis=1, keepdims=True)
    ssq_ref[...] = ssq_ref[...] + jnp.sum(act * act, axis=1, keepdims=True)

    # ---- finalize on the last grid step: normalize the resident output block -
    @pl.when(n == last)
    def _finalize():
        mean = sum_ref[...] * inv_count
        var = ssq_ref[...] * inv_count - mean * mean   # biased var (train mode)
        scale = g_ref[...] * jax.lax.rsqrt(var + eps)
        shift = beta_ref[...] - mean * scale
        o_ref[...] = o_ref[...] * scale + shift


def encode_block(x_nchw, w, b, gamma, beta, eps=1e-5):
    """x_nchw: (N, Ci, H, W); w: (Co, Ci, k, k) (PyTorch OIHW); b/gamma/beta: (Co,).
    Returns (N, Co, H//2, W//2), matching EncodeBlock.forward in training mode."""
    N, Ci, H, W = x_nchw.shape
    Co, Ci_w, k, k2 = w.shape
    assert Ci_w == Ci and k == k2 and k % 2 == 1
    assert H % 2 == 0 and W % 2 == 0
    assert (k // 2) * (W + 1) < _OFF and W + 1 <= _OFF
    Ho, Wo = H // 2, W // 2
    HW = H * W
    NP = N * Ho * Wo

    x_flat = x_nchw.reshape(N, Ci, HW).astype(jnp.float32)
    # weight rows ordered (kh, kw, ci) to match the in-kernel im2col patch rows
    w_mat = jnp.transpose(w, (0, 2, 3, 1)).reshape(Co, k * k * Ci).astype(jnp.float32)
    b2 = b.reshape(Co, 1).astype(jnp.float32)
    g2 = gamma.reshape(Co, 1).astype(jnp.float32)
    bt2 = beta.reshape(Co, 1).astype(jnp.float32)

    kernel = partial(_encode_block_kernel, H=H, W=W, k=k, eps=eps,
                     inv_count=1.0 / float(N * Ho * Wo))

    grid_spec = pltpu.PrefetchScalarGridSpec(
        num_scalar_prefetch=0,
        grid=(N,),
        in_specs=[
            pl.BlockSpec((1, Ci, HW), lambda n: (n, 0, 0)),      # one image/step
            pl.BlockSpec((Co, k * k * Ci), lambda n: (0, 0)),    # weights (resident)
            pl.BlockSpec((Co, 1), lambda n: (0, 0)),             # bias
            pl.BlockSpec((Co, 1), lambda n: (0, 0)),             # gamma
            pl.BlockSpec((Co, 1), lambda n: (0, 0)),             # beta
        ],
        out_specs=pl.BlockSpec((Co, NP), lambda n: (0, 0)),      # lane-dense, resident
        scratch_shapes=[
            pltpu.VMEM((Ci, HW + 2 * _OFF), jnp.float32),        # zero-bordered image
            pltpu.VMEM((k * k, Ci, HW), jnp.float32),            # im2col patch (tap-major)
            pltpu.VMEM((Co, HW + _OFF), jnp.float32),            # conv staging for pool
            pltpu.VMEM((Co, 1), jnp.float32),                    # per-channel sum
            pltpu.VMEM((Co, 1), jnp.float32),                    # per-channel sum of sq
        ],
    )

    out_flat = pl.pallas_call(
        kernel,
        grid_spec=grid_spec,
        out_shape=jax.ShapeDtypeStruct((Co, NP), jnp.float32),
        compiler_params=pltpu.CompilerParams(
            dimension_semantics=("arbitrary",),   # BN stats couple the grid steps
            vmem_limit_bytes=32 * 1024 * 1024),
    )(x_flat, w_mat, b2, g2, bt2)

    # lane order is (n, ho, wo); wrapper does the final (cheap) NCHW transpose
    return jnp.transpose(out_flat.reshape(Co, N, Ho, Wo), (1, 0, 2, 3))


def encode_block_ref(x_nchw, w, b, gamma, beta, eps=1e-5):
    """Pure-JAX reference mirroring the PyTorch forward (for validation)."""
    conv = jax.lax.conv_general_dilated(
        x_nchw, w, window_strides=(1, 1), padding=((1, 1), (1, 1)),
        dimension_numbers=("NCHW", "OIHW", "NCHW"))
    conv = conv + b[None, :, None, None]
    pooled = jax.lax.reduce_window(conv, -jnp.inf, jax.lax.max,
                                   (1, 1, 2, 2), (1, 1, 2, 2), "VALID")
    act = jnp.maximum(pooled, 0.0)
    mean = jnp.mean(act, axis=(0, 2, 3), keepdims=True)
    var = jnp.mean((act - mean) ** 2, axis=(0, 2, 3), keepdims=True)
    return ((act - mean) * jax.lax.rsqrt(var + eps)
            * gamma[None, :, None, None] + beta[None, :, None, None])


if __name__ == "__main__":
    # Small shapes consistent with the module: fi=4, fo=8, k=3, s=1, p=1.
    N, Ci, Co, H, W, K = 2, 4, 8, 16, 16, 3

    key = jax.random.PRNGKey(0)
    kx, kw, kb, kg, kbt = jax.random.split(key, 5)
    x = jax.random.normal(kx, (N, Ci, H, W), dtype=jnp.float32)
    w = jax.random.normal(kw, (Co, Ci, K, K), dtype=jnp.float32) * 0.1
    b = jax.random.normal(kb, (Co,), dtype=jnp.float32) * 0.1
    gamma = 1.0 + 0.1 * jax.random.normal(kg, (Co,), dtype=jnp.float32)
    beta = 0.1 * jax.random.normal(kbt, (Co,), dtype=jnp.float32)

    out = jax.block_until_ready(encode_block(x, w, b, gamma, beta))
    ref = jax.block_until_ready(encode_block_ref(x, w, b, gamma, beta))

    assert out.shape == (N, Co, H // 2, W // 2), out.shape
    max_err = float(jnp.max(jnp.abs(out - ref)))
    assert max_err < 1e-4, max_err
    print("KERNEL_OK")
</pallas_src>

<mosaic_0001>
module attributes {stable_mosaic.version = 11 : i64} {
  func.func @_encode_block_kernel(%arg0: i32, %arg1: memref<1x4x256xf32, #tpu.memory_space<vmem>>, %arg2: memref<8x36xf32, #tpu.memory_space<vmem>>, %arg3: memref<8x1xf32, #tpu.memory_space<vmem>>, %arg4: memref<8x1xf32, #tpu.memory_space<vmem>>, %arg5: memref<8x1xf32, #tpu.memory_space<vmem>>, %arg6: memref<8x128xf32, #tpu.memory_space<vmem>>, %arg7: memref<4x512xf32, #tpu.memory_space<vmem>>, %arg8: memref<9x4x256xf32, #tpu.memory_space<vmem>>, %arg9: memref<8x384xf32, #tpu.memory_space<vmem>>, %arg10: memref<8x1xf32, #tpu.memory_space<vmem>>, %arg11: memref<8x1xf32, #tpu.memory_space<vmem>>) attributes {dimension_semantics = [#tpu.dimension_semantics<arbitrary>], iteration_bounds = array<i64: 2>, scalar_prefetch = 0 : i64, scratch_operands = 5 : i64, tpu.core_type = #tpu.core_type<tc>, window_params = [{transform_indices = @transform_0, window_bounds = array<i64: 1, 4, 256>}, {pipeline_mode = #tpu.pipeline_mode<synchronous>, transform_indices = @transform_1, window_bounds = array<i64: 8, 36>}, {pipeline_mode = #tpu.pipeline_mode<synchronous>, transform_indices = @transform_2, window_bounds = array<i64: 8, 1>}, {pipeline_mode = #tpu.pipeline_mode<synchronous>, transform_indices = @transform_3, window_bounds = array<i64: 8, 1>}, {pipeline_mode = #tpu.pipeline_mode<synchronous>, transform_indices = @transform_4, window_bounds = array<i64: 8, 1>}, {pipeline_mode = #tpu.pipeline_mode<synchronous>, transform_indices = @transform_5, window_bounds = array<i64: 8, 128>}]} {
    %cst = arith.constant 0.000000e+00 : f32
    %0 = vector.broadcast %cst : f32 to vector<4x512xf32>
    %c0 = arith.constant 0 : index
    %c0_0 = arith.constant 0 : index
    %1 = vector.load %arg7[%c0, %c0_0] : memref<4x512xf32, #tpu.memory_space<vmem>>, vector<4x512xf32>
    tpu.vector_store %arg7[%c0, %c0_0], %0 {strides = array<i32>} : memref<4x512xf32, #tpu.memory_space<vmem>>, vector<4x512xf32>,
    %c0_1 = arith.constant 0 : index
    %c0_2 = arith.constant 0 : index
    %c0_3 = arith.constant 0 : index
    %2 = vector.load %arg1[%c0_1, %c0_2, %c0_3] : memref<1x4x256xf32, #tpu.memory_space<vmem>>, vector<1x4x256xf32>
    %3 = vector.shape_cast %2 : vector<1x4x256xf32> to vector<4x256xf32>
    %c0_4 = arith.constant 0 : index
    %c128 = arith.constant 128 : index
    %4 = vector.load %arg7[%c0_4, %c128] : memref<4x512xf32, #tpu.memory_space<vmem>>, vector<4x256xf32>
    tpu.vector_store %arg7[%c0_4, %c128], %3 {strides = array<i32>} : memref<4x512xf32, #tpu.memory_space<vmem>>, vector<4x256xf32>,
    %5 = tpu.iota {dimensions = array<i32: 1>} : vector<1x256xi32>
    %6 = arith.sitofp %5 : vector<1x256xi32> to vector<1x256xf32>
    %cst_5 = arith.constant 5.000000e-01 : f32
    %7 = vector.broadcast %cst_5 : f32 to vector<1x256xf32>
    %8 = arith.addf %6, %7 : vector<1x256xf32>
    %cst_6 = arith.constant 6.250000e-02 : f32
    %9 = vector.broadcast %cst_6 : f32 to vector<1x256xf32>
    %10 = arith.mulf %8, %9 : vector<1x256xf32>
    %11 = math.floor %10 : vector<1x256xf32>
    %cst_7 = arith.constant 1.600000e+01 : f32
    %12 = vector.broadcast %cst_7 : f32 to vector<1x256xf32>
    %13 = arith.mulf %11, %12 : vector<1x256xf32>
    %14 = arith.subf %6, %13 : vector<1x256xf32>
    %c0_8 = arith.constant 0 : index
    %c111 = arith.constant 111 : index
    %15 = vector.load %arg7[%c0_8, %c111] : memref<4x512xf32, #tpu.memory_space<vmem>>, vector<4x256xf32>
    %cst_9 = arith.constant 1.000000e+00 : f32
    %16 = vector.broadcast %cst_9 : f32 to vector<1x256xf32>
    %17 = arith.cmpf oge, %11, %16 : vector<1x256xf32>
    %cst_10 = arith.constant 1.600000e+01 : f32
    %18 = vector.broadcast %cst_10 : f32 to vector<1x256xf32>
    %19 = arith.cmpf ole, %11, %18 : vector<1x256xf32>
    %20 = arith.andi %17, %19 : vector<1x256xi1>
    %cst_11 = arith.constant 1.000000e+00 : f32
    %21 = vector.broadcast %cst_11 : f32 to vector<1x256xf32>
    %22 = arith.cmpf oge, %14, %21 : vector<1x256xf32>
    %23 = arith.andi %20, %22 : vector<1x256xi1>
    %cst_12 = arith.constant 1.600000e+01 : f32
    %24 = vector.broadcast %cst_12 : f32 to vector<1x256xf32>
    %25 = arith.cmpf ole, %14, %24 : vector<1x256xf32>
    %26 = arith.andi %23, %25 : vector<1x256xi1>
    %cst_13 = arith.constant 0.000000e+00 : f32
    %27 = vector.shape_cast %26 : vector<1x256xi1> to vector<1x256xi1>
    %28 = vector.broadcast %27 : vector<1x256xi1> to vector<4x256xi1>
    %29 = vector.broadcast %cst_13 : f32 to vector<4x256xf32>
    %30 = arith.select %28, %15, %29 : vector<4x256xi1>, vector<4x256xf32>
    %c0_14 = arith.constant 0 : index
    %c0_15 = arith.constant 0 : index
    %c0_16 = arith.constant 0 : index
    %31 = vector.load %arg8[%c0_14, %c0_15, %c0_16] : memref<9x4x256xf32, #tpu.memory_space<vmem>>, vector<1x4x256xf32>
    %32 = vector.shape_cast %31 : vector<1x4x256xf32> to vector<4x256xf32>
    %33 = vector.shape_cast %30 : vector<4x256xf32> to vector<1x4x256xf32>
    tpu.vector_store %arg8[%c0_14, %c0_15, %c0_16], %33 {strides = array<i32>} : memref<9x4x256xf32, #tpu.memory_space<vmem>>, vector<1x4x256xf32>,
    %c0_17 = arith.constant 0 : index
    %c112 = arith.constant 112 : index
    %34 = vector.load %arg7[%c0_17, %c112] : memref<4x512xf32, #tpu.memory_space<vmem>>, vector<4x256xf32>
    %cst_18 = arith.constant 1.000000e+00 : f32
    %35 = vector.broadcast %cst_18 : f32 to vector<1x256xf32>
    %36 = arith.cmpf oge, %11, %35 : vector<1x256xf32>
    %cst_19 = arith.constant 1.600000e+01 : f32
    %37 = vector.broadcast %cst_19 : f32 to vector<1x256xf32>
    %38 = arith.cmpf ole, %11, %37 : vector<1x256xf32>
    %39 = arith.andi %36, %38 : vector<1x256xi1>
    %cst_20 = arith.constant 0.000000e+00 : f32
    %40 = vector.broadcast %cst_20 : f32 to vector<1x256xf32>
    %41 = arith.cmpf oge, %14, %40 : vector<1x256xf32>
    %42 = arith.andi %39, %41 : vector<1x256xi1>
    %cst_21 = arith.constant 1.500000e+01 : f32
    %43 = vector.broadcast %cst_21 : f32 to vector<1x256xf32>
    %44 = arith.cmpf ole, %14, %43 : vector<1x256xf32>
    %45 = arith.andi %42, %44 : vector<1x256xi1>
    %cst_22 = arith.constant 0.000000e+00 : f32
    %46 = vector.shape_cast %45 : vector<1x256xi1> to vector<1x256xi1>
    %47 = vector.broadcast %46 : vector<1x256xi1> to vector<4x256xi1>
    %48 = vector.broadcast %cst_22 : f32 to vector<4x256xf32>
    %49 = arith.select %47, %34, %48 : vector<4x256xi1>, vector<4x256xf32>
    %c1 = arith.constant 1 : index
    %c0_23 = arith.constant 0 : index
    %c0_24 = arith.constant 0 : index
    %50 = vector.load %arg8[%c1, %c0_23, %c0_24] : memref<9x4x256xf32, #tpu.memory_space<vmem>>, vector<1x4x256xf32>
    %51 = vector.shape_cast %50 : vector<1x4x256xf32> to vector<4x256xf32>
    %52 = vector.shape_cast %49 : vector<4x256xf32> to vector<1x4x256xf32>
    tpu.vector_store %arg8[%c1, %c0_23, %c0_24], %52 {strides = array<i32>} : memref<9x4x256xf32, #tpu.memory_space<vmem>>, vector<1x4x256xf32>,
    %c0_25 = arith.constant 0 : index
    %c113 = arith.constant 113 : index
    %53 = vector.load %arg7[%c0_25, %c113] : memref<4x512xf32, #tpu.memory_space<vmem>>, vector<4x256xf32>
    %cst_26 = arith.constant 1.000000e+00 : f32
    %54 = vector.broadcast %cst_26 : f32 to vector<1x256xf32>
    %55 = arith.cmpf oge, %11, %54 : vector<1x256xf32>
    %cst_27 = arith.constant 1.600000e+01 : f32
    %56 = vector.broadcast %cst_27 : f32 to vector<1x256xf32>
    %57 = arith.cmpf ole, %11, %56 : vector<1x256xf32>
    %58 = arith.andi %55, %57 : vector<1x256xi1>
    %cst_28 = arith.constant -1.000000e+00 : f32
    %59 = vector.broadcast %cst_28 : f32 to vector<1x256xf32>
    %60 = arith.cmpf oge, %14, %59 : vector<1x256xf32>
    %61 = arith.andi %58, %60 : vector<1x256xi1>
    %cst_29 = arith.constant 1.400000e+01 : f32
    %62 = vector.broadcast %cst_29 : f32 to vector<1x256xf32>
    %63 = arith.cmpf ole, %14, %62 : vector<1x256xf32>
    %64 = arith.andi %61, %63 : vector<1x256xi1>
    %cst_30 = arith.constant 0.000000e+00 : f32
    %65 = vector.shape_cast %64 : vector<1x256xi1> to vector<1x256xi1>
    %66 = vector.broadcast %65 : vector<1x256xi1> to vector<4x256xi1>
    %67 = vector.broadcast %cst_30 : f32 to vector<4x256xf32>
    %68 = arith.select %66, %53, %67 : vector<4x256xi1>, vector<4x256xf32>
    %c2 = arith.constant 2 : index
    %c0_31 = arith.constant 0 : index
    %c0_32 = arith.constant 0 : index
    %69 = vector.load %arg8[%c2, %c0_31, %c0_32] : memref<9x4x256xf32, #tpu.memory_space<vmem>>, vector<1x4x256xf32>
    %70 = vector.shape_cast %69 : vector<1x4x256xf32> to vector<4x256xf32>
    %71 = vector.shape_cast %68 : vector<4x256xf32> to vector<1x4x256xf32>
    tpu.vector_store %arg8[%c2, %c0_31, %c0_32], %71 {strides = array<i32>} : memref<9x4x256xf32, #tpu.memory_space<vmem>>, vector<1x4x256xf32>,
    %c0_33 = arith.constant 0 : index
    %c127 = arith.constant 127 : index
    %72 = vector.load %arg7[%c0_33, %c127] : memref<4x512xf32, #tpu.memory_space<vmem>>, vector<4x256xf32>
    %cst_34 = arith.constant 0.000000e+00 : f32
    %73 = vector.broadcast %cst_34 : f32 to vector<1x256xf32>
    %74 = arith.cmpf oge, %11, %73 : vector<1x256xf32>
    %cst_35 = arith.constant 1.500000e+01 : f32
    %75 = vector.broadcast %cst_35 : f32 to vector<1x256xf32>
    %76 = arith.cmpf ole, %11, %75 : vector<1x256xf32>
    %77 = arith.andi %74, %76 : vector<1x256xi1>
    %cst_36 = arith.constant 1.000000e+00 : f32
    %78 = vector.broadcast %cst_36 : f32 to vector<1x256xf32>
    %79 = arith.cmpf oge, %14, %78 : vector<1x256xf32>
    %80 = arith.andi %77, %79 : vector<1x256xi1>
    %cst_37 = arith.constant 1.600000e+01 : f32
    %81 = vector.broadcast %cst_37 : f32 to vector<1x256xf32>
    %82 = arith.cmpf ole, %14, %81 : vector<1x256xf32>
    %83 = arith.andi %80, %82 : vector<1x256xi1>
    %cst_38 = arith.constant 0.000000e+00 : f32
    %84 = vector.shape_cast %83 : vector<1x256xi1> to vector<1x256xi1>
    %85 = vector.broadcast %84 : vector<1x256xi1> to vector<4x256xi1>
    %86 = vector.broadcast %cst_38 : f32 to vector<4x256xf32>
    %87 = arith.select %85, %72, %86 : vector<4x256xi1>, vector<4x256xf32>
    %c3 = arith.constant 3 : index
    %c0_39 = arith.constant 0 : index
    %c0_40 = arith.constant 0 : index
    %88 = vector.load %arg8[%c3, %c0_39, %c0_40] : memref<9x4x256xf32, #tpu.memory_space<vmem>>, vector<1x4x256xf32>
    %89 = vector.shape_cast %88 : vector<1x4x256xf32> to vector<4x256xf32>
    %90 = vector.shape_cast %87 : vector<4x256xf32> to vector<1x4x256xf32>
    tpu.vector_store %arg8[%c3, %c0_39, %c0_40], %90 {strides = array<i32>} : memref<9x4x256xf32, #tpu.memory_space<vmem>>, vector<1x4x256xf32>,
    %c0_41 = arith.constant 0 : index
    %c128_42 = arith.constant 128 : index
    %91 = vector.load %arg7[%c0_41, %c128_42] : memref<4x512xf32, #tpu.memory_space<vmem>>, vector<4x256xf32>
    %cst_43 = arith.constant 0.000000e+00 : f32
    %92 = vector.broadcast %cst_43 : f32 to vector<1x256xf32>
    %93 = arith.cmpf oge, %11, %92 : vector<1x256xf32>
    %cst_44 = arith.constant 1.500000e+01 : f32
    %94 = vector.broadcast %cst_44 : f32 to vector<1x256xf32>
    %95 = arith.cmpf ole, %11, %94 : vector<1x256xf32>
    %96 = arith.andi %93, %95 : vector<1x256xi1>
    %cst_45 = arith.constant 0.000000e+00 : f32
    %97 = vector.broadcast %cst_45 : f32 to vector<1x256xf32>
    %98 = arith.cmpf oge, %14, %97 : vector<1x256xf32>
    %99 = arith.andi %96, %98 : vector<1x256xi1>
    %cst_46 = arith.constant 1.500000e+01 : f32
    %100 = vector.broadcast %cst_46 : f32 to vector<1x256xf32>
    %101 = arith.cmpf ole, %14, %100 : vector<1x256xf32>
    %102 = arith.andi %99, %101 : vector<1x256xi1>
    %cst_47 = arith.constant 0.000000e+00 : f32
    %103 = vector.shape_cast %102 : vector<1x256xi1> to vector<1x256xi1>
    %104 = vector.broadcast %103 : vector<1x256xi1> to vector<4x256xi1>
    %105 = vector.broadcast %cst_47 : f32 to vector<4x256xf32>
    %106 = arith.select %104, %91, %105 : vector<4x256xi1>, vector<4x256xf32>
    %c4 = arith.constant 4 : index
    %c0_48 = arith.constant 0 : index
    %c0_49 = arith.constant 0 : index
    %107 = vector.load %arg8[%c4, %c0_48, %c0_49] : memref<9x4x256xf32, #tpu.memory_space<vmem>>, vector<1x4x256xf32>
    %108 = vector.shape_cast %107 : vector<1x4x256xf32> to vector<4x256xf32>
    %109 = vector.shape_cast %106 : vector<4x256xf32> to vector<1x4x256xf32>
    tpu.vector_store %arg8[%c4, %c0_48, %c0_49], %109 {strides = array<i32>} : memref<9x4x256xf32, #tpu.memory_space<vmem>>, vector<1x4x256xf32>,
    %c0_50 = arith.constant 0 : index
    %c129 = arith.constant 129 : index
    %110 = vector.load %arg7[%c0_50, %c129] : memref<4x512xf32, #tpu.memory_space<vmem>>, vector<4x256xf32>
    %cst_51 = arith.constant 0.000000e+00 : f32
    %111 = vector.broadcast %cst_51 : f32 to vector<1x256xf32>
    %112 = arith.cmpf oge, %11, %111 : vector<1x256xf32>
    %cst_52 = arith.constant 1.500000e+01 : f32
    %113 = vector.broadcast %cst_52 : f32 to vector<1x256xf32>
    %114 = arith.cmpf ole, %11, %113 : vector<1x256xf32>
    %115 = arith.andi %112, %114 : vector<1x256xi1>
    %cst_53 = arith.constant -1.000000e+00 : f32
    %116 = vector.broadcast %cst_53 : f32 to vector<1x256xf32>
    %117 = arith.cmpf oge, %14, %116 : vector<1x256xf32>
    %118 = arith.andi %115, %117 : vector<1x256xi1>
    %cst_54 = arith.constant 1.400000e+01 : f32
    %119 = vector.broadcast %cst_54 : f32 to vector<1x256xf32>
    %120 = arith.cmpf ole, %14, %119 : vector<1x256xf32>
    %121 = arith.andi %118, %120 : vector<1x256xi1>
    %cst_55 = arith.constant 0.000000e+00 : f32
    %122 = vector.shape_cast %121 : vector<1x256xi1> to vector<1x256xi1>
    %123 = vector.broadcast %122 : vector<1x256xi1> to vector<4x256xi1>
    %124 = vector.broadcast %cst_55 : f32 to vector<4x256xf32>
    %125 = arith.select %123, %110, %124 : vector<4x256xi1>, vector<4x256xf32>
    %c5 = arith.constant 5 : index
    %c0_56 = arith.constant 0 : index
    %c0_57 = arith.constant 0 : index
    %126 = vector.load %arg8[%c5, %c0_56, %c0_57] : memref<9x4x256xf32, #tpu.memory_space<vmem>>, vector<1x4x256xf32>
    %127 = vector.shape_cast %126 : vector<1x4x256xf32> to vector<4x256xf32>
    %128 = vector.shape_cast %125 : vector<4x256xf32> to vector<1x4x256xf32>
    tpu.vector_store %arg8[%c5, %c0_56, %c0_57], %128 {strides = array<i32>} : memref<9x4x256xf32, #tpu.memory_space<vmem>>, vector<1x4x256xf32>,
    %c0_58 = arith.constant 0 : index
    %c143 = arith.constant 143 : index
    %129 = vector.load %arg7[%c0_58, %c143] : memref<4x512xf32, #tpu.memory_space<vmem>>, vector<4x256xf32>
    %cst_59 = arith.constant -1.000000e+00 : f32
    %130 = vector.broadcast %cst_59 : f32 to vector<1x256xf32>
    %131 = arith.cmpf oge, %11, %130 : vector<1x256xf32>
    %cst_60 = arith.constant 1.400000e+01 : f32
    %132 = vector.broadcast %cst_60 : f32 to vector<1x256xf32>
    %133 = arith.cmpf ole, %11, %132 : vector<1x256xf32>
    %134 = arith.andi %131, %133 : vector<1x256xi1>
    %cst_61 = arith.constant 1.000000e+00 : f32
    %135 = vector.broadcast %cst_61 : f32 to vector<1x256xf32>
    %136 = arith.cmpf oge, %14, %135 : vector<1x256xf32>
    %137 = arith.andi %134, %136 : vector<1x256xi1>
    %cst_62 = arith.constant 1.600000e+01 : f32
    %138 = vector.broadcast %cst_62 : f32 to vector<1x256xf32>
    %139 = arith.cmpf ole, %14, %138 : vector<1x256xf32>
    %140 = arith.andi %137, %139 : vector<1x256xi1>
    %cst_63 = arith.constant 0.000000e+00 : f32
    %141 = vector.shape_cast %140 : vector<1x256xi1> to vector<1x256xi1>
    %142 = vector.broadcast %141 : vector<1x256xi1> to vector<4x256xi1>
    %143 = vector.broadcast %cst_63 : f32 to vector<4x256xf32>
    %144 = arith.select %142, %129, %143 : vector<4x256xi1>, vector<4x256xf32>
    %c6 = arith.constant 6 : index
    %c0_64 = arith.constant 0 : index
    %c0_65 = arith.constant 0 : index
    %145 = vector.load %arg8[%c6, %c0_64, %c0_65] : memref<9x4x256xf32, #tpu.memory_space<vmem>>, vector<1x4x256xf32>
    %146 = vector.shape_cast %145 : vector<1x4x256xf32> to vector<4x256xf32>
    %147 = vector.shape_cast %144 : vector<4x256xf32> to vector<1x4x256xf32>
    tpu.vector_store %arg8[%c6, %c0_64, %c0_65], %147 {strides = array<i32>} : memref<9x4x256xf32, #tpu.memory_space<vmem>>, vector<1x4x256xf32>,
    %c0_66 = arith.constant 0 : index
    %c144 = arith.constant 144 : index
    %148 = vector.load %arg7[%c0_66, %c144] : memref<4x512xf32, #tpu.memory_space<vmem>>, vector<4x256xf32>
    %cst_67 = arith.constant -1.000000e+00 : f32
    %149 = vector.broadcast %cst_67 : f32 to vector<1x256xf32>
    %150 = arith.cmpf oge, %11, %149 : vector<1x256xf32>
    %cst_68 = arith.constant 1.400000e+01 : f32
    %151 = vector.broadcast %cst_68 : f32 to vector<1x256xf32>
    %152 = arith.cmpf ole, %11, %151 : vector<1x256xf32>
    %153 = arith.andi %150, %152 : vector<1x256xi1>
    %cst_69 = arith.constant 0.000000e+00 : f32
    %154 = vector.broadcast %cst_69 : f32 to vector<1x256xf32>
    %155 = arith.cmpf oge, %14, %154 : vector<1x256xf32>
    %156 = arith.andi %153, %155 : vector<1x256xi1>
    %cst_70 = arith.constant 1.500000e+01 : f32
    %157 = vector.broadcast %cst_70 : f32 to vector<1x256xf32>
    %158 = arith.cmpf ole, %14, %157 : vector<1x256xf32>
    %159 = arith.andi %156, %158 : vector<1x256xi1>
    %cst_71 = arith.constant 0.000000e+00 : f32
    %160 = vector.shape_cast %159 : vector<1x256xi1> to vector<1x256xi1>
    %161 = vector.broadcast %160 : vector<1x256xi1> to vector<4x256xi1>
    %162 = vector.broadcast %cst_71 : f32 to vector<4x256xf32>
    %163 = arith.select %161, %148, %162 : vector<4x256xi1>, vector<4x256xf32>
    %c7 = arith.constant 7 : index
    %c0_72 = arith.constant 0 : index
    %c0_73 = arith.constant 0 : index
    %164 = vector.load %arg8[%c7, %c0_72, %c0_73] : memref<9x4x256xf32, #tpu.memory_space<vmem>>, vector<1x4x256xf32>
    %165 = vector.shape_cast %164 : vector<1x4x256xf32> to vector<4x256xf32>
    %166 = vector.shape_cast %163 : vector<4x256xf32> to vector<1x4x256xf32>
    tpu.vector_store %arg8[%c7, %c0_72, %c0_73], %166 {strides = array<i32>} : memref<9x4x256xf32, #tpu.memory_space<vmem>>, vector<1x4x256xf32>,
    %c0_74 = arith.constant 0 : index
    %c145 = arith.constant 145 : index
    %167 = vector.load %arg7[%c0_74, %c145] : memref<4x512xf32, #tpu.memory_space<vmem>>, vector<4x256xf32>
    %cst_75 = arith.constant -1.000000e+00 : f32
    %168 = vector.broadcast %cst_75 : f32 to vector<1x256xf32>
    %169 = arith.cmpf oge, %11, %168 : vector<1x256xf32>
    %cst_76 = arith.constant 1.400000e+01 : f32
    %170 = vector.broadcast %cst_76 : f32 to vector<1x256xf32>
    %171 = arith.cmpf ole, %11, %170 : vector<1x256xf32>
    %172 = arith.andi %169, %171 : vector<1x256xi1>
    %cst_77 = arith.constant -1.000000e+00 : f32
    %173 = vector.broadcast %cst_77 : f32 to vector<1x256xf32>
    %174 = arith.cmpf oge, %14, %173 : vector<1x256xf32>
    %175 = arith.andi %172, %174 : vector<1x256xi1>
    %cst_78 = arith.constant 1.400000e+01 : f32
    %176 = vector.broadcast %cst_78 : f32 to vector<1x256xf32>
    %177 = arith.cmpf ole, %14, %176 : vector<1x256xf32>
    %178 = arith.andi %175, %177 : vector<1x256xi1>
    %cst_79 = arith.constant 0.000000e+00 : f32
    %179 = vector.shape_cast %178 : vector<1x256xi1> to vector<1x256xi1>
    %180 = vector.broadcast %179 : vector<1x256xi1> to vector<4x256xi1>
    %181 = vector.broadcast %cst_79 : f32 to vector<4x256xf32>
    %182 = arith.select %180, %167, %181 : vector<4x256xi1>, vector<4x256xf32>
    %c8 = arith.constant 8 : index
    %c0_80 = arith.constant 0 : index
    %c0_81 = arith.constant 0 : index
    %183 = vector.load %arg8[%c8, %c0_80, %c0_81] : memref<9x4x256xf32, #tpu.memory_space<vmem>>, vector<1x4x256xf32>
    %184 = vector.shape_cast %183 : vector<1x4x256xf32> to vector<4x256xf32>
    %185 = vector.shape_cast %182 : vector<4x256xf32> to vector<1x4x256xf32>
    tpu.vector_store %arg8[%c8, %c0_80, %c0_81], %185 {strides = array<i32>} : memref<9x4x256xf32, #tpu.memory_space<vmem>>, vector<1x4x256xf32>,
    %c0_82 = arith.constant 0 : index
    %c0_83 = arith.constant 0 : index
    %c0_84 = arith.constant 0 : index
    %186 = vector.load %arg8[%c0_82, %c0_83, %c0_84] : memref<9x4x256xf32, #tpu.memory_space<vmem>>, vector<9x4x256xf32>
    %187 = vector.shape_cast %186 : vector<9x4x256xf32> to vector<36x256xf32>
    %c0_85 = arith.constant 0 : index
    %c0_86 = arith.constant 0 : index
    %188 = vector.load %arg2[%c0_85, %c0_86] : memref<8x36xf32, #tpu.memory_space<vmem>>, vector<8x36xf32>
    %cst_87 = arith.constant dense<0.000000e+00> : vector<8x256xf32>
    %189 = tpu.matmul %188, %187, %cst_87 {dimension_numbers = #tpu.dot_dimension_numbers<[1], [0], [0], [1], [0, 0, 1, 1], [], []>} : vector<8x36xf32>, vector<36x256xf32>, vector<8x256xf32> -> vector<8x256xf32>
    %c0_88 = arith.constant 0 : index
    %c0_89 = arith.constant 0 : index
    %190 = vector.load %arg3[%c0_88, %c0_89] : memref<8x1xf32, #tpu.memory_space<vmem>>, vector<8x1xf32>
    %191 = vector.broadcast %190 : vector<8x1xf32> to vector<8x256xf32>
    %192 = arith.addf %189, %191 : vector<8x256xf32>
    %cst_90 = arith.constant 0.000000e+00 : f32
    %193 = vector.broadcast %cst_90 : f32 to vector<8x384xf32>
    %c0_91 = arith.constant 0 : index
    %c0_92 = arith.constant 0 : index
    %194 = vector.load %arg9[%c0_91, %c0_92] : memref<8x384xf32, #tpu.memory_space<vmem>>, vector<8x384xf32>
    tpu.vector_store %arg9[%c0_91, %c0_92], %193 {strides = array<i32>} : memref<8x384xf32, #tpu.memory_space<vmem>>, vector<8x384xf32>,
    %c0_93 = arith.constant 0 : index
    %c0_94 = arith.constant 0 : index
    %195 = vector.load %arg9[%c0_93, %c0_94] : memref<8x384xf32, #tpu.memory_space<vmem>>, vector<8x256xf32>
    tpu.vector_store %arg9[%c0_93, %c0_94], %192 {strides = array<i32>} : memref<8x384xf32, #tpu.memory_space<vmem>>, vector<8x256xf32>,
    %c0_95 = arith.constant 0 : index
    %c1_96 = arith.constant 1 : index
    %196 = vector.load %arg9[%c0_95, %c1_96] : memref<8x384xf32, #tpu.memory_space<vmem>>, vector<8x256xf32>
    %c0_97 = arith.constant 0 : index
    %c16 = arith.constant 16 : index
    %197 = vector.load %arg9[%c0_97, %c16] : memref<8x384xf32, #tpu.memory_space<vmem>>, vector<8x256xf32>
    %c0_98 = arith.constant 0 : index
    %c17 = arith.constant 17 : index
    %198 = vector.load %arg9[%c0_98, %c17] : memref<8x384xf32, #tpu.memory_space<vmem>>, vector<8x256xf32>
    %199 = arith.maximumf %192, %196 : vector<8x256xf32>
    %200 = arith.maximumf %197, %198 : vector<8x256xf32>
    %201 = arith.maximumf %199, %200 : vector<8x256xf32>
    %202 = tpu.iota {dimensions = array<i32: 0>} : vector<256x1xi32>
    %203 = arith.sitofp %202 : vector<256x1xi32> to vector<256x1xf32>
    %204 = tpu.iota {dimensions = array<i32: 1>} : vector<1x128xi32>
    %205 = arith.sitofp %204 : vector<1x128xi32> to vector<1x128xf32>
    %cst_99 = arith.constant 5.000000e-01 : f32
    %206 = vector.broadcast %cst_99 : f32 to vector<256x1xf32>
    %207 = arith.addf %203, %206 : vector<256x1xf32>
    %cst_100 = arith.constant 6.250000e-02 : f32
    %208 = vector.broadcast %cst_100 : f32 to vector<256x1xf32>
    %209 = arith.mulf %207, %208 : vector<256x1xf32>
    %210 = math.floor %209 : vector<256x1xf32>
    %cst_101 = arith.constant 1.600000e+01 : f32
    %211 = vector.broadcast %cst_101 : f32 to vector<256x1xf32>
    %212 = arith.mulf %210, %211 : vector<256x1xf32>
    %213 = arith.subf %203, %212 : vector<256x1xf32>
    %cst_102 = arith.constant 5.000000e-01 : f32
    %214 = vector.broadcast %cst_102 : f32 to vector<256x1xf32>
    %215 = arith.addf %210, %214 : vector<256x1xf32>
    %cst_103 = arith.constant 5.000000e-01 : f32
    %216 = vector.broadcast %cst_103 : f32 to vector<256x1xf32>
    %217 = arith.mulf %215, %216 : vector<256x1xf32>
    %218 = math.floor %217 : vector<256x1xf32>
    %cst_104 = arith.constant 2.000000e+00 : f32
    %219 = vector.broadcast %cst_104 : f32 to vector<256x1xf32>
    %220 = arith.mulf %219, %218 : vector<256x1xf32>
    %221 = arith.subf %210, %220 : vector<256x1xf32>
    %cst_105 = arith.constant 0.000000e+00 : f32
    %222 = vector.broadcast %cst_105 : f32 to vector<256x1xf32>
    %223 = arith.cmpf oeq, %221, %222 : vector<256x1xf32>
    %cst_106 = arith.constant 5.000000e-01 : f32
    %224 = vector.broadcast %cst_106 : f32 to vector<256x1xf32>
    %225 = arith.addf %213, %224 : vector<256x1xf32>
    %cst_107 = arith.constant 5.000000e-01 : f32
    %226 = vector.broadcast %cst_107 : f32 to vector<256x1xf32>
    %227 = arith.mulf %225, %226 : vector<256x1xf32>
    %228 = math.floor %227 : vector<256x1xf32>
    %cst_108 = arith.constant 2.000000e+00 : f32
    %229 = vector.broadcast %cst_108 : f32 to vector<256x1xf32>
    %230 = arith.mulf %229, %228 : vector<256x1xf32>
    %231 = arith.subf %213, %230 : vector<256x1xf32>
    %cst_109 = arith.constant 0.000000e+00 : f32
    %232 = vector.broadcast %cst_109 : f32 to vector<256x1xf32>
    %233 = arith.cmpf oeq, %231, %232 : vector<256x1xf32>
    %234 = arith.andi %223, %233 : vector<256x1xi1>
    %c64_i32 = arith.constant 64 : i32
    %235 = arith.muli %arg0, %c64_i32 : i32
    %236 = arith.sitofp %235 : i32 to f32
    %cst_110 = arith.constant 5.000000e-01 : f32
    %237 = vector.broadcast %cst_110 : f32 to vector<256x1xf32>
    %238 = arith.addf %210, %237 : vector<256x1xf32>
    %cst_111 = arith.constant 5.000000e-01 : f32
    %239 = vector.broadcast %cst_111 : f32 to vector<256x1xf32>
    %240 = arith.mulf %238, %239 : vector<256x1xf32>
    %241 = math.floor %240 : vector<256x1xf32>
    %cst_112 = arith.constant 8.000000e+00 : f32
    %242 = vector.broadcast %cst_112 : f32 to vector<256x1xf32>
    %243 = arith.mulf %241, %242 : vector<256x1xf32>
    %244 = vector.broadcast %236 : f32 to vector<256x1xf32>
    %245 = arith.addf %244, %243 : vector<256x1xf32>
    %cst_113 = arith.constant 5.000000e-01 : f32
    %246 = vector.broadcast %cst_113 : f32 to vector<256x1xf32>
    %247 = arith.addf %213, %246 : vector<256x1xf32>
    %cst_114 = arith.constant 5.000000e-01 : f32
    %248 = vector.broadcast %cst_114 : f32 to vector<256x1xf32>
    %249 = arith.mulf %247, %248 : vector<256x1xf32>
    %250 = math.floor %249 : vector<256x1xf32>
    %251 = arith.addf %245, %250 : vector<256x1xf32>
    %252 = vector.broadcast %205 : vector<1x128xf32> to vector<256x128xf32>
    %253 = vector.broadcast %251 : vector<256x1xf32> to vector<256x128xf32>
    %254 = arith.cmpf oeq, %252, %253 : vector<256x128xf32>
    %255 = vector.broadcast %234 : vector<256x1xi1> to vector<256x128xi1>
    %256 = arith.andi %255, %254 : vector<256x128xi1>
    %cst_115 = arith.constant 1.000000e+00 : f32
    %cst_116 = arith.constant 0.000000e+00 : f32
    %257 = vector.broadcast %cst_115 : f32 to vector<256x128xf32>
    %258 = vector.broadcast %cst_116 : f32 to vector<256x128xf32>
    %259 = arith.select %256, %257, %258 : vector<256x128xi1>, vector<256x128xf32>
    %cst_117 = arith.constant dense<0.000000e+00> : vector<8x128xf32>
    %260 = tpu.matmul %201, %259, %cst_117 {dimension_numbers = #tpu.dot_dimension_numbers<[1], [0], [0], [1], [0, 0, 1, 1], [], []>} : vector<8x256xf32>, vector<256x128xf32>, vector<8x128xf32> -> vector<8x128xf32>
    %cst_118 = arith.constant 0.000000e+00 : f32
    %261 = vector.broadcast %cst_118 : f32 to vector<8x128xf32>
    %262 = arith.maximumf %260, %261 : vector<8x128xf32>
    %c0_i32 = arith.constant 0 : i32
    %263 = arith.cmpi eq, %arg0, %c0_i32 : i32
    %264 = arith.extui %263 : i1 to i32
    %c0_i32_119 = arith.constant 0 : i32
    %265 = arith.cmpi ne, %264, %c0_i32_119 : i32
    scf.if %265 {
      %cst_135 = arith.constant 0.000000e+00 : f32
      %283 = vector.broadcast %cst_135 : f32 to vector<8x128xf32>
      %c0_136 = arith.constant 0 : index
      %c0_137 = arith.constant 0 : index
      %284 = vector.load %arg6[%c0_136, %c0_137] : memref<8x128xf32, #tpu.memory_space<vmem>>, vector<8x128xf32>
      tpu.vector_store %arg6[%c0_136, %c0_137], %283 {strides = array<i32>} : memref<8x128xf32, #tpu.memory_space<vmem>>, vector<8x128xf32>,
      %cst_138 = arith.constant 0.000000e+00 : f32
      %285 = vector.broadcast %cst_138 : f32 to vector<8x1xf32>
      %c0_139 = arith.constant 0 : index
      %c0_140 = arith.constant 0 : index
      %286 = vector.load %arg10[%c0_139, %c0_140] : memref<8x1xf32, #tpu.memory_space<vmem>>, vector<8x1xf32>
      tpu.vector_store %arg10[%c0_139, %c0_140], %285 {strides = array<i32>} : memref<8x1xf32, #tpu.memory_space<vmem>>, vector<8x1xf32>,
      %cst_141 = arith.constant 0.000000e+00 : f32
      %287 = vector.broadcast %cst_141 : f32 to vector<8x1xf32>
      %c0_142 = arith.constant 0 : index
      %c0_143 = arith.constant 0 : index
      %288 = vector.load %arg11[%c0_142, %c0_143] : memref<8x1xf32, #tpu.memory_space<vmem>>, vector<8x1xf32>
      tpu.vector_store %arg11[%c0_142, %c0_143], %287 {strides = array<i32>} : memref<8x1xf32, #tpu.memory_space<vmem>>, vector<8x1xf32>,
    } else {
    }
    %c0_120 = arith.constant 0 : index
    %c0_121 = arith.constant 0 : index
    %266 = vector.load %arg6[%c0_120, %c0_121] : memref<8x128xf32, #tpu.memory_space<vmem>>, vector<8x128xf32>
    %267 = arith.addf %266, %262 : vector<8x128xf32>
    %c0_122 = arith.constant 0 : index
    %c0_123 = arith.constant 0 : index
    %268 = vector.load %arg6[%c0_122, %c0_123] : memref<8x128xf32, #tpu.memory_space<vmem>>, vector<8x128xf32>
    tpu.vector_store %arg6[%c0_122, %c0_123], %267 {strides = array<i32>} : memref<8x128xf32, #tpu.memory_space<vmem>>, vector<8x128xf32>,
    %c0_124 = arith.constant 0 : index
    %c0_125 = arith.constant 0 : index
    %269 = vector.load %arg10[%c0_124, %c0_125] : memref<8x1xf32, #tpu.memory_space<vmem>>, vector<8x1xf32>
    %cst_126 = arith.constant dense<0.000000e+00> : vector<8xf32>
    %270 = vector.multi_reduction <add>, %262, %cst_126 [1] : vector<8x128xf32> to vector<8xf32>
    %271 = vector.shape_cast %270 : vector<8xf32> to vector<8x1xf32>
    %272 = arith.addf %269, %271 : vector<8x1xf32>
    %c0_127 = arith.constant 0 : index
    %c0_128 = arith.constant 0 : index
    %273 = vector.load %arg10[%c0_127, %c0_128] : memref<8x1xf32, #tpu.memory_space<vmem>>, vector<8x1xf32>
    tpu.vector_store %arg10[%c0_127, %c0_128], %272 {strides = array<i32>} : memref<8x1xf32, #tpu.memory_space<vmem>>, vector<8x1xf32>,
    %c0_129 = arith.constant 0 : index
    %c0_130 = arith.constant 0 : index
    %274 = vector.load %arg11[%c0_129, %c0_130] : memref<8x1xf32, #tpu.memory_space<vmem>>, vector<8x1xf32>
    %275 = arith.mulf %262, %262 : vector<8x128xf32>
    %cst_131 = arith.constant dense<0.000000e+00> : vector<8xf32>
    %276 = vector.multi_reduction <add>, %275, %cst_131 [1] : vector<8x128xf32> to vector<8xf32>
    %277 = vector.shape_cast %276 : vector<8xf32> to vector<8x1xf32>
    %278 = arith.addf %274, %277 : vector<8x1xf32>
    %c0_132 = arith.constant 0 : index
    %c0_133 = arith.constant 0 : index
    %279 = vector.load %arg11[%c0_132, %c0_133] : memref<8x1xf32, #tpu.memory_space<vmem>>, vector<8x1xf32>
    tpu.vector_store %arg11[%c0_132, %c0_133], %278 {strides = array<i32>} : memref<8x1xf32, #tpu.memory_space<vmem>>, vector<8x1xf32>,
    %c1_i32 = arith.constant 1 : i32
    %280 = arith.cmpi eq, %arg0, %c1_i32 : i32
    %281 = arith.extui %280 : i1 to i32
    %c0_i32_134 = arith.constant 0 : i32
    %282 = arith.cmpi ne, %281, %c0_i32_134 : i32
    scf.if %282 {
      %c0_135 = arith.constant 0 : index
      %c0_136 = arith.constant 0 : index
      %283 = vector.load %arg10[%c0_135, %c0_136] : memref<8x1xf32, #tpu.memory_space<vmem>>, vector<8x1xf32>
      %cst_137 = arith.constant 7.812500e-03 : f32
      %284 = vector.broadcast %cst_137 : f32 to vector<8x1xf32>
      %285 = arith.mulf %283, %284 : vector<8x1xf32>
      %c0_138 = arith.constant 0 : index
      %c0_139 = arith.constant 0 : index
      %286 = vector.load %arg11[%c0_138, %c0_139] : memref<8x1xf32, #tpu.memory_space<vmem>>, vector<8x1xf32>
      %cst_140 = arith.constant 7.812500e-03 : f32
      %287 = vector.broadcast %cst_140 : f32 to vector<8x1xf32>
      %288 = arith.mulf %286, %287 : vector<8x1xf32>
      %289 = arith.mulf %285, %285 : vector<8x1xf32>
      %290 = arith.subf %288, %289 : vector<8x1xf32>
      %c0_141 = arith.constant 0 : index
      %c0_142 = arith.constant 0 : index
      %291 = vector.load %arg4[%c0_141, %c0_142] : memref<8x1xf32, #tpu.memory_space<vmem>>, vector<8x1xf32>
      %cst_143 = arith.constant 9.99999974E-6 : f32
      %292 = vector.broadcast %cst_143 : f32 to vector<8x1xf32>
      %293 = arith.addf %290, %292 : vector<8x1xf32>
      %294 = math.rsqrt %293 : vector<8x1xf32>
      %295 = arith.mulf %291, %294 : vector<8x1xf32>
      %c0_144 = arith.constant 0 : index
      %c0_145 = arith.constant 0 : index
      %296 = vector.load %arg5[%c0_144, %c0_145] : memref<8x1xf32, #tpu.memory_space<vmem>>, vector<8x1xf32>
      %297 = arith.mulf %285, %295 : vector<8x1xf32>
      %298 = arith.subf %296, %297 : vector<8x1xf32>
      %c0_146 = arith.constant 0 : index
      %c0_147 = arith.constant 0 : index
      %299 = vector.load %arg6[%c0_146, %c0_147] : memref<8x128xf32, #tpu.memory_space<vmem>>, vector<8x128xf32>
      %300 = vector.broadcast %295 : vector<8x1xf32> to vector<8x128xf32>
      %301 = arith.mulf %299, %300 : vector<8x128xf32>
      %302 = vector.broadcast %298 : vector<8x1xf32> to vector<8x128xf32>
      %303 = arith.addf %301, %302 : vector<8x128xf32>
      %c0_148 = arith.constant 0 : index
      %c0_149 = arith.constant 0 : index
      %304 = vector.load %arg6[%c0_148, %c0_149] : memref<8x128xf32, #tpu.memory_space<vmem>>, vector<8x128xf32>
      tpu.vector_store %arg6[%c0_148, %c0_149], %303 {strides = array<i32>} : memref<8x128xf32, #tpu.memory_space<vmem>>, vector<8x128xf32>,
    } else {
    }
    return
  }
  func.func @transform_0(%arg0: i32) -> (i32, i32, i32) {
    %c0_i32 = arith.constant 0 : i32
    %c0_i32_0 = arith.constant 0 : i32
    %c0_i32_1 = arith.constant 0 : i32
    return %arg0, %c0_i32, %c0_i32_0 : i32, i32, i32
  }
  func.func @transform_1(%arg0: i32) -> (i32, i32) {
    %c0_i32 = arith.constant 0 : i32
    %c0_i32_0 = arith.constant 0 : i32
    %c0_i32_1 = arith.constant 0 : i32
    return %c0_i32, %c0_i32_0 : i32, i32
  }
  func.func @transform_2(%arg0: i32) -> (i32, i32) {
    %c0_i32 = arith.constant 0 : i32
    %c0_i32_0 = arith.constant 0 : i32
    %c0_i32_1 = arith.constant 0 : i32
    return %c0_i32, %c0_i32_0 : i32, i32
  }
  func.func @transform_3(%arg0: i32) -> (i32, i32) {
    %c0_i32 = arith.constant 0 : i32
    %c0_i32_0 = arith.constant 0 : i32
    %c0_i32_1 = arith.constant 0 : i32
    return %c0_i32, %c0_i32_0 : i32, i32
  }
  func.func @transform_4(%arg0: i32) -> (i32, i32) {
    %c0_i32 = arith.constant 0 : i32
    %c0_i32_0 = arith.constant 0 : i32
    %c0_i32_1 = arith.constant 0 : i32
    return %c0_i32, %c0_i32_0 : i32, i32
  }
  func.func @transform_5(%arg0: i32) -> (i32, i32) {
    %c0_i32 = arith.constant 0 : i32
    %c0_i32_0 = arith.constant 0 : i32
    %c0_i32_1 = arith.constant 0 : i32
    return %c0_i32, %c0_i32_0 : i32, i32
  }
}

</mosaic_0001>

<llo_original>
// kernel: tpu_custom_call.1
$region0: #{tpu_custom_call.1}
  #allocation0 [shape = 'u32[]', space=smem, size = 0x4, offset = 0x4, fixed_abs, tag = 'smem constant byte address 0x4 - core index']
  #allocation1 [shape = 'u32[144,128]{1,0:T(1,128)}', space=vmem, size = 0x12000, scoped, tag = 'internal scratch']
  #allocation2 [shape = 'f32[4,512]{1,0:T(4,128)}', space=vmem, size = 0x2000, scoped, tag = 'scratch operand']
  #allocation3 [shape = 'f32[9,4,256]{2,1,0:T(4,128)}', space=vmem, size = 0x9000, scoped, tag = 'scratch operand']
  #allocation4 [shape = 'f32[8,384]{1,0:T(8,128)}', space=vmem, size = 0x3000, scoped, tag = 'scratch operand']
  #allocation5 [shape = 'f32[8,1]{1,0:T(8,128)}', space=vmem, size = 0x1000, scoped, tag = 'scratch operand']
  #allocation6 [shape = 'f32[8,1]{1,0:T(8,128)}', space=vmem, size = 0x1000, scoped, tag = 'scratch operand']
  %s0 = inlined_call_operand.vmem [shape: f32[2,4,256], index: 0, kind: input, shape index: {}]
  %s1 = inlined_call_operand.vmem [shape: f32[8,36], index: 1, kind: input, shape index: {}]
  %s2 = inlined_call_operand.vmem [shape: f32[8,1], index: 2, kind: input, shape index: {}]
  %s3 = inlined_call_operand.vmem [shape: f32[8,1], index: 3, kind: input, shape index: {}]
  %s4 = inlined_call_operand.vmem [shape: f32[8,1], index: 4, kind: input, shape index: {}]
  %s5 = inlined_call_operand.hbm [shape: f32[8,128], index: 5, kind: output, shape index: {}]
  %s6 = sld [smem:[#allocation0]]
  $region61: #{tpu_custom_call.1} parent=0
    _
  %s8 = ssub.s32 1, %s6
  %s9 = scalar_select 0, %s8, %s6
  $region1: #{tpu_custom_call.1} parent=0
    #allocation7 [shape = 'u8[4096]{0}', space=vmem, size = 0x1000, scoped, tag = 'output window, operand 0, single buffered']
    #allocation8 [shape = 's32[2]{0}', space=sflag, size = 0x8, scoped, tag = 'scoped memory for tpu_custom_call.1']
    %10 = vsyncpa [#allocation8], 0
    loop: start=0, step=1, limit=4
    $region2: #{tpu_custom_call.1} parent=1 // loop_pre_header
      _
    $region3: #{tpu_custom_call.1} parent=1 // loop_header
      %s12 = sphi 0, %s16
      %p13 = scmp.ge.s32.totalorder %s12, 4
      %s22 = sphi 0, %s24
      %s25 = sphi 0, %s22
      %s26 = sphi 0, %s25
      %s42 = sphi 0, %s26
      %s46 = sphi 0, %s46
      %s48 = sphi 0, %s46
      %s49 = sphi 0, %s48
      %s63 = sphi 0, %s49
      %s67 = sphi 0, %s67
      %s69 = sphi 0, %s67
      %s70 = sphi 0, %s69
      %s84 = sphi 0, %s70
      %s88 = sphi 0, %s88
      %s90 = sphi 0, %s88
      %s91 = sphi 0, %s90
      %s105 = sphi 0, %s91
      %s109 = sphi 0, %s109
      %s111 = sphi 0, %s109
      %s112 = sphi 0, %s111
      %s126 = sphi 0, %s112
      %s130 = sphi 0, %s130
      %s132 = sphi 0, %s130
      %s133 = sphi 0, %s132
      %s147 = sphi 0, %s133
    $region4: #{tpu_custom_call.1} parent=1 // loop_header_branch
      %15 = sbr.rel (%p13) target = $region8
    $region5: #{tpu_custom_call.1} parent=1 // loop_body
      %s17 = ssub.s32 %s12, 1
      %s18 = ssub.s32 %s12, 2
      %s19 = sadd.s32 %s12, 1
      %s20 = ssub.s32 %s12, %s19
      %p21 = scmp.eq.s32.totalorder %s20, 0
      %s23 = sadd.s32 %s22, 1
      %s24 = scalar_select %p21, %s22, %s23
      %p27 = pneg %p21
      %p28 = scmp.eq.s32.totalorder %s12, 1
      %p29 = por %p27, %p28
      %p30 = scmp.ne.s32.totalorder %s22, %s25
      %p31 = scmp.eq.s32.totalorder %s12, 0
      %p32 = por %p30, %p31
      %p33 = scmp.ne.s32.totalorder %s22, %s25
      %p34 = scmp.eq.s32.totalorder %s17, 1
      %p35 = por %p33, %p34
      %p36 = scmp.ne.s32.totalorder %s25, %s26
      %p37 = scmp.eq.s32.totalorder %s17, 0
      %p38 = por %p36, %p37
      %p39 = scmp.ne.s32.totalorder %s25, %s26
      %p40 = scmp.eq.s32.totalorder %s18, 1
      %p41 = por %p39, %p40
      %p43 = scmp.ne.s32.totalorder %s26, %s42
      %p44 = scmp.eq.s32.totalorder %s18, 0
      %p45 = por %p43, %p44
      %s47 = sadd.s32 %s46, 1
      %p50 = scmp.eq.s32.totalorder %s12, 1
      %p51 = scmp.ne.s32.totalorder %s46, %s48
      %p52 = scmp.eq.s32.totalorder %s12, 0
      %p53 = por %p51, %p52
      %p54 = scmp.ne.s32.totalorder %s46, %s48
      %p55 = scmp.eq.s32.totalorder %s17, 1
      %p56 = por %p54, %p55
      %p57 = scmp.ne.s32.totalorder %s48, %s49
      %p58 = scmp.eq.s32.totalorder %s17, 0
      %p59 = por %p57, %p58
      %p60 = scmp.ne.s32.totalorder %s48, %s49
      %p61 = scmp.eq.s32.totalorder %s18, 1
      %p62 = por %p60, %p61
      %p64 = scmp.ne.s32.totalorder %s49, %s63
      %p65 = scmp.eq.s32.totalorder %s18, 0
      %p66 = por %p64, %p65
      %s68 = sadd.s32 %s67, 1
      %p71 = scmp.eq.s32.totalorder %s12, 1
      %p72 = scmp.ne.s32.totalorder %s67, %s69
      %p73 = scmp.eq.s32.totalorder %s12, 0
      %p74 = por %p72, %p73
      %p75 = scmp.ne.s32.totalorder %s67, %s69
      %p76 = scmp.eq.s32.totalorder %s17, 1
      %p77 = por %p75, %p76
      %p78 = scmp.ne.s32.totalorder %s69, %s70
      %p79 = scmp.eq.s32.totalorder %s17, 0
      %p80 = por %p78, %p79
      %p81 = scmp.ne.s32.totalorder %s69, %s70
      %p82 = scmp.eq.s32.totalorder %s18, 1
      %p83 = por %p81, %p82
      %p85 = scmp.ne.s32.totalorder %s70, %s84
      %p86 = scmp.eq.s32.totalorder %s18, 0
      %p87 = por %p85, %p86
      %s89 = sadd.s32 %s88, 1
      %p92 = scmp.eq.s32.totalorder %s12, 1
      %p93 = scmp.ne.s32.totalorder %s88, %s90
      %p94 = scmp.eq.s32.totalorder %s12, 0
      %p95 = por %p93, %p94
      %p96 = scmp.ne.s32.totalorder %s88, %s90
      %p97 = scmp.eq.s32.totalorder %s17, 1
      %p98 = por %p96, %p97
      %p99 = scmp.ne.s32.totalorder %s90, %s91
      %p100 = scmp.eq.s32.totalorder %s17, 0
      %p101 = por %p99, %p100
      %p102 = scmp.ne.s32.totalorder %s90, %s91
      %p103 = scmp.eq.s32.totalorder %s18, 1
      %p104 = por %p102, %p103
      %p106 = scmp.ne.s32.totalorder %s91, %s105
      %p107 = scmp.eq.s32.totalorder %s18, 0
      %p108 = por %p106, %p107
      %s110 = sadd.s32 %s109, 1
      %p113 = scmp.eq.s32.totalorder %s12, 1
      %p114 = scmp.ne.s32.totalorder %s109, %s111
      %p115 = scmp.eq.s32.totalorder %s12, 0
      %p116 = por %p114, %p115
      %p117 = scmp.ne.s32.totalorder %s109, %s111
      %p118 = scmp.eq.s32.totalorder %s17, 1
      %p119 = por %p117, %p118
      %p120 = scmp.ne.s32.totalorder %s111, %s112
      %p121 = scmp.eq.s32.totalorder %s17, 0
      %p122 = por %p120, %p121
      %p123 = scmp.ne.s32.totalorder %s111, %s112
      %p124 = scmp.eq.s32.totalorder %s18, 1
      %p125 = por %p123, %p124
      %p127 = scmp.ne.s32.totalorder %s112, %s126
      %p128 = scmp.eq.s32.totalorder %s18, 0
      %p129 = por %p127, %p128
      %s131 = sadd.s32 %s130, 1
      %p134 = scmp.eq.s32.totalorder %s12, 1
      %p135 = scmp.ne.s32.totalorder %s130, %s132
      %p136 = scmp.eq.s32.totalorder %s12, 0
      %p137 = por %p135, %p136
      %p138 = scmp.ne.s32.totalorder %s130, %s132
      %p139 = scmp.eq.s32.totalorder %s17, 1
      %p140 = por %p138, %p139
      %p141 = scmp.ne.s32.totalorder %s132, %s133
      %p142 = scmp.eq.s32.totalorder %s17, 0
      %p143 = por %p141, %p142
      %p144 = scmp.ne.s32.totalorder %s132, %s133
      %p145 = scmp.eq.s32.totalorder %s18, 1
      %p146 = por %p144, %p145
      %p148 = scmp.ne.s32.totalorder %s133, %s147
      %p149 = scmp.eq.s32.totalorder %s18, 0
      %p150 = por %p148, %p149
      %p151 = scmp.le.s32.totalorder 1, %s12
      %p152 = scmp.lt.s32.totalorder %s12, 3
      %p153 = pnand %p151, %p152
      %p154 = pneg %p153
      // Predicated region
      $region9: #{tpu_custom_call.1} parent=5 // pred_check
        _
      $region10: #{tpu_custom_call.1} parent=5 // pred_check_branch
        %156 = sbr.rel (%p153) target = $region12
      $region11: #{tpu_custom_call.1} parent=5 // pred_region
        %s157 = ssub.s32 %s12, 1
        // Predicated region
        $region13: #{tpu_custom_call.1} parent=11 // pred_check
          %p158 = pneg %p59
        $region14: #{tpu_custom_call.1} parent=11 // pred_check_branch
          %160 = sbr.rel (%p158) target = $region16
        $region15: #{tpu_custom_call.1} parent=11 // pred_region
          _
        $region16: #{tpu_custom_call.1} parent=11 // pred_fallthru
          _
        // Predicated region
        $region17: #{tpu_custom_call.1} parent=11 // pred_check
          %p161 = pneg %p80
        $region18: #{tpu_custom_call.1} parent=11 // pred_check_branch
          %163 = sbr.rel (%p161) target = $region20
        $region19: #{tpu_custom_call.1} parent=11 // pred_region
          _
        $region20: #{tpu_custom_call.1} parent=11 // pred_fallthru
          _
        // Predicated region
        $region21: #{tpu_custom_call.1} parent=11 // pred_check
          %p164 = pneg %p101
        $region22: #{tpu_custom_call.1} parent=11 // pred_check_branch
          %166 = sbr.rel (%p164) target = $region24
        $region23: #{tpu_custom_call.1} parent=11 // pred_region
          _
        $region24: #{tpu_custom_call.1} parent=11 // pred_fallthru
          _
        // Predicated region
        $region25: #{tpu_custom_call.1} parent=11 // pred_check
          %p167 = pneg %p122
        $region26: #{tpu_custom_call.1} parent=11 // pred_check_branch
          %169 = sbr.rel (%p167) target = $region28
        $region27: #{tpu_custom_call.1} parent=11 // pred_region
          _
        $region28: #{tpu_custom_call.1} parent=11 // pred_fallthru
          _
      $region12: #{tpu_custom_call.1} parent=5 // pred_fallthru
        _
      %p170 = scmp.lt.s32.totalorder %s12, 2
      // Predicated region
      $region29: #{tpu_custom_call.1} parent=5 // pred_check
        %p171 = pneg %p170
      $region30: #{tpu_custom_call.1} parent=5 // pred_check_branch
        %173 = sbr.rel (%p171) target = $region32
      $region31: #{tpu_custom_call.1} parent=5 // pred_region
        // Predicated region
        $region33: #{tpu_custom_call.1} parent=31 // pred_check
          %p174 = pneg %p32
        $region34: #{tpu_custom_call.1} parent=31 // pred_check_branch
          %176 = sbr.rel (%p174) target = $region36
        $region35: #{tpu_custom_call.1} parent=31 // pred_region
          %p177 = scmp.lt.s32.totalorder %s12, 1
          %s178 = scalar_select %p177, %s12, 1
          %s179 = smul.addr %s178, 2
          %s180 = smul.addr %s179, 4
          %s181 = scalar_lea.vmem %s0, %s180
        $region36: #{tpu_custom_call.1} parent=31 // pred_fallthru
          _
      $region32: #{tpu_custom_call.1} parent=5 // pred_fallthru
        _
      %p182 = scmp.le.s32.totalorder 1, %s12
      %p183 = scmp.lt.s32.totalorder %s12, 3
      %p184 = pnand %p182, %p183
      %p185 = pneg %p184
      // Predicated region
      $region37: #{tpu_custom_call.1} parent=5 // pred_check
        _
      $region38: #{tpu_custom_call.1} parent=5 // pred_check_branch
        %187 = sbr.rel (%p184) target = $region40
      $region39: #{tpu_custom_call.1} parent=5 // pred_region
        %s188 = ssub.s32 %s12, 1
        %p189 = scmp.lt.s32.totalorder %s17, 1
        %s190 = scalar_select %p189, %s17, 1
        %s191 = smul.addr %s190, 2
        %s192 = smul.addr %s191, 4
        %s193 = scalar_lea.vmem %s0, %s192
        %p194 = pneg %p38
        %p195 = pneg %p35
        %p196 = pneg %p59
        %p197 = pneg %p56
        %p198 = pneg %p80
        %p199 = pneg %p77
        %p200 = pneg %p101
        %p201 = pneg %p98
        %p202 = pneg %p122
        %p203 = pneg %p119
        %p204 = pneg %p143
        %p205 = pneg %p140
        %p206 = scmp.lt.s32.totalorder %s17, 1
        %s207 = scalar_select %p206, %s17, 1
        %s208 = smul.addr %s207, 2
        %s209 = smul.addr %s208, 4
        %s210 = scalar_lea.vmem %s0, %s209
        %211 = vst [vmem:[#allocation2] sm:$0xff] 0.0
        %212 = vst [vmem:[#allocation2 + $0x8] sm:$0xff] 0.0
        %v213 = vld [vmem:[%s210] sm:$0xff]
        %214 = vst [vmem:[#allocation2 + $0x4] sm:$0xff] %v213
        %v215 = vlaneseq
        %v216 = vand.u32 %v215, 127
        %v217 = vadd.s32 %v216, 128
        %v218 = vcvt.s32.f32 %v216
        %v219 = vcvt.s32.f32 %v217
        %v220 = vadd.f32 %v218, 0.5
        %v221 = vadd.f32 %v219, 0.5
        %v222 = vmul.f32 %v220, 0.0625
        %v223 = vmul.f32 %v221, 0.0625
        %v224 = vfloor.f32 %v222
        %v225 = vfloor.f32 %v223
        %v226 = vmul.f32 %v224, 16.0
        %v227 = vmul.f32 %v225, 16.0
        %v228 = vsub.f32 %v218, %v226
        %v229 = vsub.f32 %v219, %v227
        %v230 = vld [vmem:[#allocation2] sm:$0xff]
        %v231 = vld [vmem:[#allocation2 + $0x8] sm:$0xf]
        %vm232 = vcmp.ge.f32.partialorder %v224, 1.0
        %vm233 = vcmp.ge.f32.partialorder %v225, 1.0
        %vm234 = vcmp.le.f32.partialorder %v224, 16.0
        %vm235 = vcmp.le.f32.partialorder %v225, 16.0
        %vm236 = vmand %vm232, %vm234
        %vm237 = vmand %vm233, %vm235
        %vm238 = vcmp.ge.f32.partialorder %v228, 1.0
        %vm239 = vcmp.ge.f32.partialorder %v229, 1.0
        %vm240 = vmand %vm236, %vm238
        %vm241 = vmand %vm237, %vm239
        %vm242 = vcmp.le.f32.partialorder %v228, 16.0
        %vm243 = vcmp.le.f32.partialorder %v229, 16.0
        %vm244 = vmand %vm240, %vm242
        %vm245 = vmand %vm241, %vm243
        %v246 = vsel %vm244, 1, 0
        %v247 = vsel %vm245, 1, 0
        %vm248 = vcmp.eq.s32.totalorder %v246, 1
        %vm249 = vcmp.eq.s32.totalorder %v247, 1
        %v252 = vcombine.high %v230, %v230
        %253 = vrot.lane.b32.xlu0 %v230, 17
        %v254 = vpop.permute.xlu0 %253
        %255 = vrot.lane.b32.xlu0 %v252, 17
        %v256 = vpop.permute.xlu0 %255
        %257 = vrot.lane.b32.xlu0 %v231, 17
        %v258 = vpop.permute.xlu0 %257
        %vm259 = vcmask 138240
        %v260 = vsel %vm259, %v254, %v256
        %v261 = vsel %vm259, %v256, %v258
        %v264 = vsel %vm248, %v260, 0.0
        %v265 = vsel %vm249, %v261, 0.0
        %v268 = vcombine.low %v264, %v265
        %270 = vst [vmem:[#allocation3] sm:$0xff] %v268
        %v271 = vld [vmem:[#allocation2] sm:$0xff]
        %v272 = vld [vmem:[#allocation2 + $0x8] sm:$0xf]
        %vm273 = vcmp.ge.f32.partialorder %v228, 0.0
        %vm274 = vcmp.ge.f32.partialorder %v229, 0.0
        %vm275 = vmand %vm236, %vm273
        %vm276 = vmand %vm237, %vm274
        %vm277 = vcmp.le.f32.partialorder %v228, 15.0
        %vm278 = vcmp.le.f32.partialorder %v229, 15.0
        %vm279 = vmand %vm275, %vm277
        %vm280 = vmand %vm276, %vm278
        %v281 = vsel %vm279, 1, 0
        %v282 = vsel %vm280, 1, 0
        %vm283 = vcmp.eq.s32.totalorder %v281, 1
        %vm284 = vcmp.eq.s32.totalorder %v282, 1
        %v287 = vcombine.high %v271, %v271
        %288 = vrot.lane.b32.xlu0 %v271, 16
        %v289 = vpop.permute.xlu0 %288
        %290 = vrot.lane.b32.xlu0 %v287, 16
        %v291 = vpop.permute.xlu0 %290
        %292 = vrot.lane.b32.xlu0 %v272, 16
        %v293 = vpop.permute.xlu0 %292
        %vm294 = vcmask 130048
        %v295 = vsel %vm294, %v289, %v291
        %v296 = vsel %vm294, %v291, %v293
        %v299 = vsel %vm283, %v295, 0.0
        %v300 = vsel %vm284, %v296, 0.0
        %v303 = vcombine.low %v299, %v300
        %s305 = scalar_lea.vmem [#allocation3], 8
        %306 = vst [vmem:[%s305] sm:$0xff] %v303
        %v307 = vld [vmem:[#allocation2] sm:$0xff]
        %v308 = vld [vmem:[#allocation2 + $0x8] sm:$0xf]
        %vm309 = vcmp.ge.f32.partialorder %v228, -1.0
        %vm310 = vcmp.ge.f32.partialorder %v229, -1.0
        %vm311 = vmand %vm236, %vm309
        %vm312 = vmand %vm237, %vm310
        %vm313 = vcmp.le.f32.partialorder %v228, 14.0
        %vm314 = vcmp.le.f32.partialorder %v229, 14.0
        %vm315 = vmand %vm311, %vm313
        %vm316 = vmand %vm312, %vm314
        %v317 = vsel %vm315, 1, 0
        %v318 = vsel %vm316, 1, 0
        %vm319 = vcmp.eq.s32.totalorder %v317, 1
        %vm320 = vcmp.eq.s32.totalorder %v318, 1
        %v323 = vcombine.high %v307, %v307
        %324 = vrot.lane.b32.xlu0 %v307, 15
        %v325 = vpop.permute.xlu0 %324
        %326 = vrot.lane.b32.xlu0 %v323, 15
        %v327 = vpop.permute.xlu0 %326
        %328 = vrot.lane.b32.xlu0 %v308, 15
        %v329 = vpop.permute.xlu0 %328
        %vm330 = vcmask 121856
        %v331 = vsel %vm330, %v325, %v327
        %v332 = vsel %vm330, %v327, %v329
        %v335 = vsel %vm319, %v331, 0.0
        %v336 = vsel %vm320, %v332, 0.0
        %v339 = vcombine.low %v335, %v336
        %s341 = scalar_lea.vmem [#allocation3], 16
        %342 = vst [vmem:[%s341] sm:$0xff] %v339
        %v343 = vld [vmem:[#allocation2] sm:$0xff]
        %v344 = vld [vmem:[#allocation2 + $0x8] sm:$0xf]
        %vm345 = vcmp.ge.f32.partialorder %v224, 0.0
        %vm346 = vcmp.ge.f32.partialorder %v225, 0.0
        %vm347 = vcmp.le.f32.partialorder %v224, 15.0
        %vm348 = vcmp.le.f32.partialorder %v225, 15.0
        %vm349 = vmand %vm345, %vm347
        %vm350 = vmand %vm346, %vm348
        %vm351 = vmand %vm349, %vm238
        %vm352 = vmand %vm350, %vm239
        %vm353 = vmand %vm351, %vm242
        %vm354 = vmand %vm352, %vm243
        %v355 = vsel %vm353, 1, 0
        %v356 = vsel %vm354, 1, 0
        %vm357 = vcmp.eq.s32.totalorder %v355, 1
        %vm358 = vcmp.eq.s32.totalorder %v356, 1
        %v361 = vcombine.high %v343, %v343
        %362 = vrot.lane.b32.xlu0 %v343, 1
        %v363 = vpop.permute.xlu0 %362
        %364 = vrot.lane.b32.xlu0 %v361, 1
        %v365 = vpop.permute.xlu0 %364
        %366 = vrot.lane.b32.xlu0 %v344, 1
        %v367 = vpop.permute.xlu0 %366
        %vm368 = vcmask 7168
        %v369 = vsel %vm368, %v363, %v365
        %v370 = vsel %vm368, %v365, %v367
        %v373 = vsel %vm357, %v369, 0.0
        %v374 = vsel %vm358, %v370, 0.0
        %v377 = vcombine.low %v373, %v374
        %s379 = scalar_lea.vmem [#allocation3], 24
        %380 = vst [vmem:[%s379] sm:$0xff] %v377
        %v381 = vld [vmem:[#allocation2 + $0x4] sm:$0xff]
        %vm382 = vmand %vm349, %vm273
        %vm383 = vmand %vm350, %vm274
        %vm384 = vmand %vm382, %vm277
        %vm385 = vmand %vm383, %vm278
        %v386 = vsel %vm384, 1, 0
        %v387 = vsel %vm385, 1, 0
        %vm388 = vcmp.eq.s32.totalorder %v386, 1
        %vm389 = vcmp.eq.s32.totalorder %v387, 1
        %v391 = vcombine.high %v381, %v381
        %v393 = vsel %vm388, %v381, 0.0
        %v394 = vsel %vm389, %v391, 0.0
        %v397 = vcombine.low %v393, %v394
        %s399 = scalar_lea.vmem [#allocation3], 32
        %400 = vst [vmem:[%s399] sm:$0xff] %v397
        %v401 = vld [vmem:[#allocation2 + $0x4] sm:$0xff]
        %v402 = vld [vmem:[#allocation2 + $0xc] sm:$0xf]
        %vm403 = vmand %vm349, %vm309
        %vm404 = vmand %vm350, %vm310
        %vm405 = vmand %vm403, %vm313
        %vm406 = vmand %vm404, %vm314
        %v407 = vsel %vm405, 1, 0
        %v408 = vsel %vm406, 1, 0
        %vm409 = vcmp.eq.s32.totalorder %v407, 1
        %vm410 = vcmp.eq.s32.totalorder %v408, 1
        %v413 = vcombine.high %v401, %v401
        %414 = vrot.lane.b32.xlu0 %v401, 127
        %v415 = vpop.permute.xlu0 %414
        %416 = vrot.lane.b32.xlu0 %v413, 127
        %v417 = vpop.permute.xlu0 %416
        %418 = vrot.lane.b32.xlu0 %v402, 127
        %v419 = vpop.permute.xlu0 %418
        %vm420 = vcmask 1039360
        %v421 = vsel %vm420, %v415, %v417
        %v422 = vsel %vm420, %v417, %v419
        %v425 = vsel %vm409, %v421, 0.0
        %v426 = vsel %vm410, %v422, 0.0
        %v429 = vcombine.low %v425, %v426
        %s431 = scalar_lea.vmem [#allocation3], 40
        %432 = vst [vmem:[%s431] sm:$0xff] %v429
        %v433 = vld [vmem:[#allocation2 + $0x4] sm:$0xff]
        %v434 = vld [vmem:[#allocation2 + $0xc] sm:$0xf]
        %vm435 = vcmp.ge.f32.partialorder %v224, -1.0
        %vm436 = vcmp.ge.f32.partialorder %v225, -1.0
        %vm437 = vcmp.le.f32.partialorder %v224, 14.0
        %vm438 = vcmp.le.f32.partialorder %v225, 14.0
        %vm439 = vmand %vm435, %vm437
        %vm440 = vmand %vm436, %vm438
        %vm441 = vmand %vm439, %vm238
        %vm442 = vmand %vm440, %vm239
        %vm443 = vmand %vm441, %vm242
        %vm444 = vmand %vm442, %vm243
        %v445 = vsel %vm443, 1, 0
        %v446 = vsel %vm444, 1, 0
        %vm447 = vcmp.eq.s32.totalorder %v445, 1
        %vm448 = vcmp.eq.s32.totalorder %v446, 1
        %v451 = vcombine.high %v433, %v433
        %452 = vrot.lane.b32.xlu0 %v433, 113
        %v453 = vpop.permute.xlu0 %452
        %454 = vrot.lane.b32.xlu0 %v451, 113
        %v455 = vpop.permute.xlu0 %454
        %456 = vrot.lane.b32.xlu0 %v434, 113
        %v457 = vpop.permute.xlu0 %456
        %vm458 = vcmask 924672
        %v459 = vsel %vm458, %v453, %v455
        %v460 = vsel %vm458, %v455, %v457
        %v463 = vsel %vm447, %v459, 0.0
        %v464 = vsel %vm448, %v460, 0.0
        %v467 = vcombine.low %v463, %v464
        %s469 = scalar_lea.vmem [#allocation3], 48
        %470 = vst [vmem:[%s469] sm:$0xff] %v467
        %v471 = vld [vmem:[#allocation2 + $0x4] sm:$0xff]
        %v472 = vld [vmem:[#allocation2 + $0xc] sm:$0xf]
        %vm473 = vmand %vm439, %vm273
        %vm474 = vmand %vm440, %vm274
        %vm475 = vmand %vm473, %vm277
        %vm476 = vmand %vm474, %vm278
        %v477 = vsel %vm475, 1, 0
        %v478 = vsel %vm476, 1, 0
        %vm479 = vcmp.eq.s32.totalorder %v477, 1
        %vm480 = vcmp.eq.s32.totalorder %v478, 1
        %v483 = vcombine.high %v471, %v471
        %484 = vrot.lane.b32.xlu0 %v471, 112
        %v485 = vpop.permute.xlu0 %484
        %486 = vrot.lane.b32.xlu0 %v483, 112
        %v487 = vpop.permute.xlu0 %486
        %488 = vrot.lane.b32.xlu0 %v472, 112
        %v489 = vpop.permute.xlu0 %488
        %vm490 = vcmask 916480
        %v491 = vsel %vm490, %v485, %v487
        %v492 = vsel %vm490, %v487, %v489
        %v495 = vsel %vm479, %v491, 0.0
        %v496 = vsel %vm480, %v492, 0.0
        %v499 = vcombine.low %v495, %v496
        %s501 = scalar_lea.vmem [#allocation3], 56
        %502 = vst [vmem:[%s501] sm:$0xff] %v499
        %v503 = vld [vmem:[#allocation2 + $0x4] sm:$0xff]
        %v504 = vld [vmem:[#allocation2 + $0xc] sm:$0xf]
        %vm505 = vmand %vm439, %vm309
        %vm506 = vmand %vm440, %vm310
        %vm507 = vmand %vm505, %vm313
        %vm508 = vmand %vm506, %vm314
        %v509 = vsel %vm507, 1, 0
        %v510 = vsel %vm508, 1, 0
        %vm511 = vcmp.eq.s32.totalorder %v509, 1
        %vm512 = vcmp.eq.s32.totalorder %v510, 1
        %v515 = vcombine.high %v503, %v503
        %516 = vrot.lane.b32.xlu0 %v503, 111
        %v517 = vpop.permute.xlu0 %516
        %518 = vrot.lane.b32.xlu0 %v515, 111
        %v519 = vpop.permute.xlu0 %518
        %520 = vrot.lane.b32.xlu0 %v504, 111
        %v521 = vpop.permute.xlu0 %520
        %vm522 = vcmask 908288
        %v523 = vsel %vm522, %v517, %v519
        %v524 = vsel %vm522, %v519, %v521
        %v527 = vsel %vm511, %v523, 0.0
        %v528 = vsel %vm512, %v524, 0.0
        %v531 = vcombine.low %v527, %v528
        %s533 = scalar_lea.vmem [#allocation3], 64
        %534 = vst [vmem:[%s533] sm:$0xff] %v531
        %v535 = vld [vmem:[#allocation3] sm:$0xff]
        %v536 = vld [vmem:[#allocation3 + $0x8] sm:$0xff]
        %v537 = vld [vmem:[#allocation3 + $0x10] sm:$0xff]
        %v538 = vld [vmem:[#allocation3 + $0x18] sm:$0xff]
        %v539 = vld [vmem:[#allocation3 + $0x20] sm:$0xff]
        %v540 = vld [vmem:[#allocation3 + $0x28] sm:$0xff]
        %v541 = vld [vmem:[#allocation3 + $0x30] sm:$0xff]
        %v542 = vld [vmem:[#allocation3 + $0x38] sm:$0xff]
        %v543 = vld [vmem:[#allocation3 + $0x40] sm:$0xff]
        %v544 = vld [vmem:[%s1] sm:$0xff]
        %v545 = vld [vmem:[%s2] sm:$0xff]
        %547 = vset.pattern.permute.xlu0 0
        %548 = vperm.xlu0 %547, %v545
        %v549 = vpop.permute.xlu0 %548
        %v560 = vcombine.low %v535, %v536
        %v561 = vcombine.high %v535, %v536
        %v562 = vcombine.low %v537, %v538
        %v563 = vcombine.high %v537, %v538
        %v564 = vcombine.low %v539, %v540
        %v565 = vcombine.high %v539, %v540
        %v566 = vcombine.low %v541, %v542
        %v567 = vcombine.high %v541, %v542
        %v568 = vcombine.high %v543, %v543
        %vm577 = vcmask 293888
        %v579 = vsel %vm577, %v544, 0
        %vm581 = vcmask 1043456
        %v582 = vsel %vm581, %v543, 0
        %v584 = vsel %vm581, %v568, 0
        %586 = vmatprep.subr.mxu0 0.0
        %587 = vmatpush1.msra.mxu0 0.0
        %588 = vmatprep.subr.mxu0 0.0
        %589 = vmatpush1.msra.mxu0 0.0
        %590 = vmatprep.subr.mxu0 0.0
        %591 = vmatpush1.msra.mxu0 0.0
        %592 = vmatprep.subr.mxu0 0.0
        %593 = vmatpush1.msra.mxu0 0.0
        %594 = vmatprep.subr.mxu0 0.0
        %595 = vmatpush1.msra.mxu0 0.0
        %596 = vmatprep.subr.mxu0 0.0
        %597 = vmatpush1.msra.mxu0 0.0
        %598 = vmatprep.subr.mxu0 0.0
        %599 = vmatpush1.msra.mxu0 0.0
        %600 = vmatprep.subr.mxu0 0.0
        %601 = vmatpush1.msra.mxu0 0.0
        %602 = vmatprep.subr.mxu0 0.0
        %603 = vmatpush1.msra.mxu0 0.0
        %604 = vmatprep.subr.mxu0 0.0
        %605 = vmatpush1.msra.mxu0 0.0
        %606 = vmatprep.subr.mxu0 0.0
        %607 = vmatpush1.msra.mxu0 0.0
        %608 = vmatprep.subr.mxu0 %v584
        %609 = vmatpush1.msra.mxu0 %v582
        %610 = vmatprep.subr.mxu0 %v567
        %611 = vmatpush1.msra.mxu0 %v566
        %612 = vmatprep.subr.mxu0 %v565
        %613 = vmatpush1.msra.mxu0 %v564
        %614 = vmatprep.subr.mxu0 %v563
        %615 = vmatpush1.msra.mxu0 %v562
        %616 = vmatprep.subr.mxu0 %v561
        %617 = vmatpush1.msra.mxu0 %v560
        %618 = vmatprep.subr.mxu0 0.0
        %619 = vmatpush2.msra.mxu0 0.0
        %620 = vmatprep.subr.mxu0 0.0
        %621 = vmatpush2.msra.mxu0 0.0
        %622 = vmatprep.subr.mxu0 0.0
        %623 = vmatpush2.msra.mxu0 0.0
        %624 = vmatprep.subr.mxu0 0.0
        %625 = vmatpush2.msra.mxu0 0.0
        %626 = vmatprep.subr.mxu0 0.0
        %627 = vmatpush2.msra.mxu0 0.0
        %628 = vmatprep.subr.mxu0 0.0
        %629 = vmatpush2.msra.mxu0 0.0
        %630 = vmatprep.subr.mxu0 0.0
        %631 = vmatpush2.msra.mxu0 0.0
        %632 = vmatprep.subr.mxu0 0.0
        %633 = vmatpush2.msra.mxu0 0.0
        %634 = vmatprep.subr.mxu0 0.0
        %635 = vmatpush2.msra.mxu0 0.0
        %636 = vmatprep.subr.mxu0 0.0
        %637 = vmatpush2.msra.mxu0 0.0
        %638 = vmatprep.subr.mxu0 0.0
        %639 = vmatpush2.msra.mxu0 0.0
        %640 = vmatprep.subr.mxu0 0.0
        %641 = vmatpush2.msra.mxu0 0.0
        %642 = vmatprep.subr.mxu0 0.0
        %643 = vmatpush2.msra.mxu0 0.0
        %644 = vmatprep.subr.mxu0 0.0
        %645 = vmatpush2.msra.mxu0 0.0
        %646 = vmatprep.subr.mxu0 0.0
        %647 = vmatpush2.msra.mxu0 0.0
        %648 = vmatprep.subr.mxu0 0.0
        %649 = vmatpush2.msra.mxu0 0.0
        %650 = vmatprep.mubr.f32.mxu0 0.0
        %651 = vmatmul.mubr.f32.gmra.mxu0 %v579
        %v652 = vpop.f32.mrf.mxu0
        %v653 = vadd.f32 %v549, %v652
        %v654 = vpop.f32.mrf.mxu0
        %v655 = vadd.f32 %v549, %v654
        %656 = vdwg.mxu0
        %657 = vst [vmem:[#allocation4] sm:$0xff] 0.0
        %658 = vst [vmem:[#allocation4 + $0x8] sm:$0xff] 0.0
        %659 = vst [vmem:[#allocation4 + $0x10] sm:$0xff] 0.0
        %660 = vst [vmem:[#allocation4] sm:$0xff] %v653
        %661 = vst [vmem:[#allocation4 + $0x8] sm:$0xff] %v655
        %v662 = vld [vmem:[#allocation4] sm:$0xff]
        %v663 = vld [vmem:[#allocation4 + $0x8] sm:$0xff]
        %v664 = vld [vmem:[#allocation4 + $0x10] sm:$0xff]
        %668 = vrot.lane.b32.xlu0 %v662, 127
        %v669 = vpop.permute.xlu0 %668
        %670 = vrot.lane.b32.xlu0 %v663, 127
        %v671 = vpop.permute.xlu0 %670
        %672 = vrot.lane.b32.xlu0 %v664, 127
        %v673 = vpop.permute.xlu0 %672
        %v674 = vsel %vm420, %v669, %v671
        %v675 = vsel %vm420, %v671, %v673
        %v678 = vmax.f32 %v653, %v674
        %v679 = vmax.f32 %v655, %v675
        %v681 = vmax.f32 %v662, %v674
        %v682 = vmax.f32 %v663, %v675
        %v683 = vmax.f32 %v664, %v673
        %687 = vrot.lane.b32.xlu0 %v681, 112
        %v688 = vpop.permute.xlu0 %687
        %689 = vrot.lane.b32.xlu0 %v682, 112
        %v690 = vpop.permute.xlu0 %689
        %691 = vrot.lane.b32.xlu0 %v683, 112
        %v692 = vpop.permute.xlu0 %691
        %v693 = vsel %vm490, %v688, %v690
        %v694 = vsel %vm490, %v690, %v692
        %v697 = vmax.f32 %v678, %v693
        %v698 = vmax.f32 %v679, %v694
        %v699 = vlaneseq
        %v700 = vshrl.u32 %v699, 7
        %v701 = vadd.s32 %v700, 8
        %v702 = vadd.s32 %v700, 16
        %v703 = vadd.s32 %v700, 24
        %v704 = vadd.s32 %v700, 32
        %v705 = vadd.s32 %v700, 40
        %v706 = vadd.s32 %v700, 48
        %v707 = vadd.s32 %v700, 56
        %v708 = vadd.s32 %v700, 64
        %v709 = vadd.s32 %v700, 72
        %v710 = vadd.s32 %v700, 80
        %v711 = vadd.s32 %v700, 88
        %v712 = vadd.s32 %v700, 96
        %v713 = vadd.s32 %v700, 104
        %v714 = vadd.s32 %v700, 112
        %v715 = vadd.s32 %v700, 120
        %v716 = vadd.s32 %v700, 128
        %v717 = vadd.s32 %v700, 136
        %v718 = vadd.s32 %v700, 144
        %v719 = vadd.s32 %v700, 152
        %v720 = vadd.s32 %v700, 160
        %v721 = vadd.s32 %v700, 168
        %v722 = vadd.s32 %v700, 176
        %v723 = vadd.s32 %v700, 184
        %v724 = vadd.s32 %v700, 192
        %v725 = vadd.s32 %v700, 200
        %v726 = vadd.s32 %v700, 208
        %v727 = vadd.s32 %v700, 216
        %v728 = vadd.s32 %v700, 224
        %v729 = vadd.s32 %v700, 232
        %v730 = vadd.s32 %v700, 240
        %v731 = vadd.s32 %v700, 248
        %v732 = vcvt.s32.f32 %v700
        %v733 = vcvt.s32.f32 %v701
        %v734 = vcvt.s32.f32 %v702
        %v735 = vcvt.s32.f32 %v703
        %v736 = vcvt.s32.f32 %v704
        %v737 = vcvt.s32.f32 %v705
        %v738 = vcvt.s32.f32 %v706
        %v739 = vcvt.s32.f32 %v707
        %v740 = vcvt.s32.f32 %v708
        %v741 = vcvt.s32.f32 %v709
        %v742 = vcvt.s32.f32 %v710
        %v743 = vcvt.s32.f32 %v711
        %v744 = vcvt.s32.f32 %v712
        %v745 = vcvt.s32.f32 %v713
        %v746 = vcvt.s32.f32 %v714
        %v747 = vcvt.s32.f32 %v715
        %v748 = vcvt.s32.f32 %v716
        %v749 = vcvt.s32.f32 %v717
        %v750 = vcvt.s32.f32 %v718
        %v751 = vcvt.s32.f32 %v719
        %v752 = vcvt.s32.f32 %v720
        %v753 = vcvt.s32.f32 %v721
        %v754 = vcvt.s32.f32 %v722
        %v755 = vcvt.s32.f32 %v723
        %v756 = vcvt.s32.f32 %v724
        %v757 = vcvt.s32.f32 %v725
        %v758 = vcvt.s32.f32 %v726
        %v759 = vcvt.s32.f32 %v727
        %v760 = vcvt.s32.f32 %v728
        %v761 = vcvt.s32.f32 %v729
        %v762 = vcvt.s32.f32 %v730
        %v763 = vcvt.s32.f32 %v731
        %v764 = vadd.f32 %v732, 0.5
        %v765 = vadd.f32 %v733, 0.5
        %v766 = vadd.f32 %v734, 0.5
        %v767 = vadd.f32 %v735, 0.5
        %v768 = vadd.f32 %v736, 0.5
        %v769 = vadd.f32 %v737, 0.5
        %v770 = vadd.f32 %v738, 0.5
        %v771 = vadd.f32 %v739, 0.5
        %v772 = vadd.f32 %v740, 0.5
        %v773 = vadd.f32 %v741, 0.5
        %v774 = vadd.f32 %v742, 0.5
        %v775 = vadd.f32 %v743, 0.5
        %v776 = vadd.f32 %v744, 0.5
        %v777 = vadd.f32 %v745, 0.5
        %v778 = vadd.f32 %v746, 0.5
        %v779 = vadd.f32 %v747, 0.5
        %v780 = vadd.f32 %v748, 0.5
        %v781 = vadd.f32 %v749, 0.5
        %v782 = vadd.f32 %v750, 0.5
        %v783 = vadd.f32 %v751, 0.5
        %v784 = vadd.f32 %v752, 0.5
        %v785 = vadd.f32 %v753, 0.5
        %v786 = vadd.f32 %v754, 0.5
        %v787 = vadd.f32 %v755, 0.5
        %v788 = vadd.f32 %v756, 0.5
        %v789 = vadd.f32 %v757, 0.5
        %v790 = vadd.f32 %v758, 0.5
        %v791 = vadd.f32 %v759, 0.5
        %v792 = vadd.f32 %v760, 0.5
        %v793 = vadd.f32 %v761, 0.5
        %v794 = vadd.f32 %v762, 0.5
        %v795 = vadd.f32 %v763, 0.5
        %v796 = vmul.f32 %v764, 0.0625
        %v797 = vmul.f32 %v765, 0.0625
        %v798 = vmul.f32 %v766, 0.0625
        %v799 = vmul.f32 %v767, 0.0625
        %v800 = vmul.f32 %v768, 0.0625
        %v801 = vmul.f32 %v769, 0.0625
        %v802 = vmul.f32 %v770, 0.0625
        %v803 = vmul.f32 %v771, 0.0625
        %v804 = vmul.f32 %v772, 0.0625
        %v805 = vmul.f32 %v773, 0.0625
        %v806 = vmul.f32 %v774, 0.0625
        %v807 = vmul.f32 %v775, 0.0625
        %v808 = vmul.f32 %v776, 0.0625
        %v809 = vmul.f32 %v777, 0.0625
        %v810 = vmul.f32 %v778, 0.0625
        %v811 = vmul.f32 %v779, 0.0625
        %v812 = vmul.f32 %v780, 0.0625
        %v813 = vmul.f32 %v781, 0.0625
        %v814 = vmul.f32 %v782, 0.0625
        %v815 = vmul.f32 %v783, 0.0625
        %v816 = vmul.f32 %v784, 0.0625
        %v817 = vmul.f32 %v785, 0.0625
        %v818 = vmul.f32 %v786, 0.0625
        %v819 = vmul.f32 %v787, 0.0625
        %v820 = vmul.f32 %v788, 0.0625
        %v821 = vmul.f32 %v789, 0.0625
        %v822 = vmul.f32 %v790, 0.0625
        %v823 = vmul.f32 %v791, 0.0625
        %v824 = vmul.f32 %v792, 0.0625
        %v825 = vmul.f32 %v793, 0.0625
        %v826 = vmul.f32 %v794, 0.0625
        %v827 = vmul.f32 %v795, 0.0625
        %v828 = vfloor.f32 %v796
        %v829 = vfloor.f32 %v797
        %v830 = vfloor.f32 %v798
        %v831 = vfloor.f32 %v799
        %v832 = vfloor.f32 %v800
        %v833 = vfloor.f32 %v801
        %v834 = vfloor.f32 %v802
        %v835 = vfloor.f32 %v803
        %v836 = vfloor.f32 %v804
        %v837 = vfloor.f32 %v805
        %v838 = vfloor.f32 %v806
        %v839 = vfloor.f32 %v807
        %v840 = vfloor.f32 %v808
        %v841 = vfloor.f32 %v809
        %v842 = vfloor.f32 %v810
        %v843 = vfloor.f32 %v811
        %v844 = vfloor.f32 %v812
        %v845 = vfloor.f32 %v813
        %v846 = vfloor.f32 %v814
        %v847 = vfloor.f32 %v815
        %v848 = vfloor.f32 %v816
        %v849 = vfloor.f32 %v817
        %v850 = vfloor.f32 %v818
        %v851 = vfloor.f32 %v819
        %v852 = vfloor.f32 %v820
        %v853 = vfloor.f32 %v821
        %v854 = vfloor.f32 %v822
        %v855 = vfloor.f32 %v823
        %v856 = vfloor.f32 %v824
        %v857 = vfloor.f32 %v825
        %v858 = vfloor.f32 %v826
        %v859 = vfloor.f32 %v827
        %v860 = vmul.f32 %v828, 16.0
        %v861 = vmul.f32 %v829, 16.0
        %v862 = vmul.f32 %v830, 16.0
        %v863 = vmul.f32 %v831, 16.0
        %v864 = vmul.f32 %v832, 16.0
        %v865 = vmul.f32 %v833, 16.0
        %v866 = vmul.f32 %v834, 16.0
        %v867 = vmul.f32 %v835, 16.0
        %v868 = vmul.f32 %v836, 16.0
        %v869 = vmul.f32 %v837, 16.0
        %v870 = vmul.f32 %v838, 16.0
        %v871 = vmul.f32 %v839, 16.0
        %v872 = vmul.f32 %v840, 16.0
        %v873 = vmul.f32 %v841, 16.0
        %v874 = vmul.f32 %v842, 16.0
        %v875 = vmul.f32 %v843, 16.0
        %v876 = vmul.f32 %v844, 16.0
        %v877 = vmul.f32 %v845, 16.0
        %v878 = vmul.f32 %v846, 16.0
        %v879 = vmul.f32 %v847, 16.0
        %v880 = vmul.f32 %v848, 16.0
        %v881 = vmul.f32 %v849, 16.0
        %v882 = vmul.f32 %v850, 16.0
        %v883 = vmul.f32 %v851, 16.0
        %v884 = vmul.f32 %v852, 16.0
        %v885 = vmul.f32 %v853, 16.0
        %v886 = vmul.f32 %v854, 16.0
        %v887 = vmul.f32 %v855, 16.0
        %v888 = vmul.f32 %v856, 16.0
        %v889 = vmul.f32 %v857, 16.0
        %v890 = vmul.f32 %v858, 16.0
        %v891 = vmul.f32 %v859, 16.0
        %v892 = vsub.f32 %v732, %v860
        %v893 = vsub.f32 %v733, %v861
        %v894 = vsub.f32 %v734, %v862
        %v895 = vsub.f32 %v735, %v863
        %v896 = vsub.f32 %v736, %v864
        %v897 = vsub.f32 %v737, %v865
        %v898 = vsub.f32 %v738, %v866
        %v899 = vsub.f32 %v739, %v867
        %v900 = vsub.f32 %v740, %v868
        %v901 = vsub.f32 %v741, %v869
        %v902 = vsub.f32 %v742, %v870
        %v903 = vsub.f32 %v743, %v871
        %v904 = vsub.f32 %v744, %v872
        %v905 = vsub.f32 %v745, %v873
        %v906 = vsub.f32 %v746, %v874
        %v907 = vsub.f32 %v747, %v875
        %v908 = vsub.f32 %v748, %v876
        %v909 = vsub.f32 %v749, %v877
        %v910 = vsub.f32 %v750, %v878
        %v911 = vsub.f32 %v751, %v879
        %v912 = vsub.f32 %v752, %v880
        %v913 = vsub.f32 %v753, %v881
        %v914 = vsub.f32 %v754, %v882
        %v915 = vsub.f32 %v755, %v883
        %v916 = vsub.f32 %v756, %v884
        %v917 = vsub.f32 %v757, %v885
        %v918 = vsub.f32 %v758, %v886
        %v919 = vsub.f32 %v759, %v887
        %v920 = vsub.f32 %v760, %v888
        %v921 = vsub.f32 %v761, %v889
        %v922 = vsub.f32 %v762, %v890
        %v923 = vsub.f32 %v763, %v891
        %v924 = vadd.f32 %v828, 0.5
        %v925 = vadd.f32 %v829, 0.5
        %v926 = vadd.f32 %v830, 0.5
        %v927 = vadd.f32 %v831, 0.5
        %v928 = vadd.f32 %v832, 0.5
        %v929 = vadd.f32 %v833, 0.5
        %v930 = vadd.f32 %v834, 0.5
        %v931 = vadd.f32 %v835, 0.5
        %v932 = vadd.f32 %v836, 0.5
        %v933 = vadd.f32 %v837, 0.5
        %v934 = vadd.f32 %v838, 0.5
        %v935 = vadd.f32 %v839, 0.5
        %v936 = vadd.f32 %v840, 0.5
        %v937 = vadd.f32 %v841, 0.5
        %v938 = vadd.f32 %v842, 0.5
        %v939 = vadd.f32 %v843, 0.5
        %v940 = vadd.f32 %v844, 0.5
        %v941 = vadd.f32 %v845, 0.5
        %v942 = vadd.f32 %v846, 0.5
        %v943 = vadd.f32 %v847, 0.5
        %v944 = vadd.f32 %v848, 0.5
        %v945 = vadd.f32 %v849, 0.5
        %v946 = vadd.f32 %v850, 0.5
        %v947 = vadd.f32 %v851, 0.5
        %v948 = vadd.f32 %v852, 0.5
        %v949 = vadd.f32 %v853, 0.5
        %v950 = vadd.f32 %v854, 0.5
        %v951 = vadd.f32 %v855, 0.5
        %v952 = vadd.f32 %v856, 0.5
        %v953 = vadd.f32 %v857, 0.5
        %v954 = vadd.f32 %v858, 0.5
        %v955 = vadd.f32 %v859, 0.5
        %v956 = vmul.f32 %v924, 0.5
        %v957 = vmul.f32 %v925, 0.5
        %v958 = vmul.f32 %v926, 0.5
        %v959 = vmul.f32 %v927, 0.5
        %v960 = vmul.f32 %v928, 0.5
        %v961 = vmul.f32 %v929, 0.5
        %v962 = vmul.f32 %v930, 0.5
        %v963 = vmul.f32 %v931, 0.5
        %v964 = vmul.f32 %v932, 0.5
        %v965 = vmul.f32 %v933, 0.5
        %v966 = vmul.f32 %v934, 0.5
        %v967 = vmul.f32 %v935, 0.5
        %v968 = vmul.f32 %v936, 0.5
        %v969 = vmul.f32 %v937, 0.5
        %v970 = vmul.f32 %v938, 0.5
        %v971 = vmul.f32 %v939, 0.5
        %v972 = vmul.f32 %v940, 0.5
        %v973 = vmul.f32 %v941, 0.5
        %v974 = vmul.f32 %v942, 0.5
        %v975 = vmul.f32 %v943, 0.5
        %v976 = vmul.f32 %v944, 0.5
        %v977 = vmul.f32 %v945, 0.5
        %v978 = vmul.f32 %v946, 0.5
        %v979 = vmul.f32 %v947, 0.5
        %v980 = vmul.f32 %v948, 0.5
        %v981 = vmul.f32 %v949, 0.5
        %v982 = vmul.f32 %v950, 0.5
        %v983 = vmul.f32 %v951, 0.5
        %v984 = vmul.f32 %v952, 0.5
        %v985 = vmul.f32 %v953, 0.5
        %v986 = vmul.f32 %v954, 0.5
        %v987 = vmul.f32 %v955, 0.5
        %v988 = vfloor.f32 %v956
        %v989 = vfloor.f32 %v957
        %v990 = vfloor.f32 %v958
        %v991 = vfloor.f32 %v959
        %v992 = vfloor.f32 %v960
        %v993 = vfloor.f32 %v961
        %v994 = vfloor.f32 %v962
        %v995 = vfloor.f32 %v963
        %v996 = vfloor.f32 %v964
        %v997 = vfloor.f32 %v965
        %v998 = vfloor.f32 %v966
        %v999 = vfloor.f32 %v967
        %v1000 = vfloor.f32 %v968
        %v1001 = vfloor.f32 %v969
        %v1002 = vfloor.f32 %v970
        %v1003 = vfloor.f32 %v971
        %v1004 = vfloor.f32 %v972
        %v1005 = vfloor.f32 %v973
        %v1006 = vfloor.f32 %v974
        %v1007 = vfloor.f32 %v975
        %v1008 = vfloor.f32 %v976
        %v1009 = vfloor.f32 %v977
        %v1010 = vfloor.f32 %v978
        %v1011 = vfloor.f32 %v979
        %v1012 = vfloor.f32 %v980
        %v1013 = vfloor.f32 %v981
        %v1014 = vfloor.f32 %v982
        %v1015 = vfloor.f32 %v983
        %v1016 = vfloor.f32 %v984
        %v1017 = vfloor.f32 %v985
        %v1018 = vfloor.f32 %v986
        %v1019 = vfloor.f32 %v987
        %v1020 = vmul.f32 %v988, 2.0
        %v1021 = vmul.f32 %v989, 2.0
        %v1022 = vmul.f32 %v990, 2.0
        %v1023 = vmul.f32 %v991, 2.0
        %v1024 = vmul.f32 %v992, 2.0
        %v1025 = vmul.f32 %v993, 2.0
        %v1026 = vmul.f32 %v994, 2.0
        %v1027 = vmul.f32 %v995, 2.0
        %v1028 = vmul.f32 %v996, 2.0
        %v1029 = vmul.f32 %v997, 2.0
        %v1030 = vmul.f32 %v998, 2.0
        %v1031 = vmul.f32 %v999, 2.0
        %v1032 = vmul.f32 %v1000, 2.0
        %v1033 = vmul.f32 %v1001, 2.0
        %v1034 = vmul.f32 %v1002, 2.0
        %v1035 = vmul.f32 %v1003, 2.0
        %v1036 = vmul.f32 %v1004, 2.0
        %v1037 = vmul.f32 %v1005, 2.0
        %v1038 = vmul.f32 %v1006, 2.0
        %v1039 = vmul.f32 %v1007, 2.0
        %v1040 = vmul.f32 %v1008, 2.0
        %v1041 = vmul.f32 %v1009, 2.0
        %v1042 = vmul.f32 %v1010, 2.0
        %v1043 = vmul.f32 %v1011, 2.0
        %v1044 = vmul.f32 %v1012, 2.0
        %v1045 = vmul.f32 %v1013, 2.0
        %v1046 = vmul.f32 %v1014, 2.0
        %v1047 = vmul.f32 %v1015, 2.0
        %v1048 = vmul.f32 %v1016, 2.0
        %v1049 = vmul.f32 %v1017, 2.0
        %v1050 = vmul.f32 %v1018, 2.0
        %v1051 = vmul.f32 %v1019, 2.0
        %v1052 = vsub.f32 %v828, %v1020
        %v1053 = vsub.f32 %v829, %v1021
        %v1054 = vsub.f32 %v830, %v1022
        %v1055 = vsub.f32 %v831, %v1023
        %v1056 = vsub.f32 %v832, %v1024
        %v1057 = vsub.f32 %v833, %v1025
        %v1058 = vsub.f32 %v834, %v1026
        %v1059 = vsub.f32 %v835, %v1027
        %v1060 = vsub.f32 %v836, %v1028
        %v1061 = vsub.f32 %v837, %v1029
        %v1062 = vsub.f32 %v838, %v1030
        %v1063 = vsub.f32 %v839, %v1031
        %v1064 = vsub.f32 %v840, %v1032
        %v1065 = vsub.f32 %v841, %v1033
        %v1066 = vsub.f32 %v842, %v1034
        %v1067 = vsub.f32 %v843, %v1035
        %v1068 = vsub.f32 %v844, %v1036
        %v1069 = vsub.f32 %v845, %v1037
        %v1070 = vsub.f32 %v846, %v1038
        %v1071 = vsub.f32 %v847, %v1039
        %v1072 = vsub.f32 %v848, %v1040
        %v1073 = vsub.f32 %v849, %v1041
        %v1074 = vsub.f32 %v850, %v1042
        %v1075 = vsub.f32 %v851, %v1043
        %v1076 = vsub.f32 %v852, %v1044
        %v1077 = vsub.f32 %v853, %v1045
        %v1078 = vsub.f32 %v854, %v1046
        %v1079 = vsub.f32 %v855, %v1047
        %v1080 = vsub.f32 %v856, %v1048
        %v1081 = vsub.f32 %v857, %v1049
        %v1082 = vsub.f32 %v858, %v1050
        %v1083 = vsub.f32 %v859, %v1051
        %vm1084 = vcmp.eq.f32.partialorder %v1052, 0.0
        %vm1085 = vcmp.eq.f32.partialorder %v1053, 0.0
        %vm1086 = vcmp.eq.f32.partialorder %v1054, 0.0
        %vm1087 = vcmp.eq.f32.partialorder %v1055, 0.0
        %vm1088 = vcmp.eq.f32.partialorder %v1056, 0.0
        %vm1089 = vcmp.eq.f32.partialorder %v1057, 0.0
        %vm1090 = vcmp.eq.f32.partialorder %v1058, 0.0
        %vm1091 = vcmp.eq.f32.partialorder %v1059, 0.0
        %vm1092 = vcmp.eq.f32.partialorder %v1060, 0.0
        %vm1093 = vcmp.eq.f32.partialorder %v1061, 0.0
        %vm1094 = vcmp.eq.f32.partialorder %v1062, 0.0
        %vm1095 = vcmp.eq.f32.partialorder %v1063, 0.0
        %vm1096 = vcmp.eq.f32.partialorder %v1064, 0.0
        %vm1097 = vcmp.eq.f32.partialorder %v1065, 0.0
        %vm1098 = vcmp.eq.f32.partialorder %v1066, 0.0
        %vm1099 = vcmp.eq.f32.partialorder %v1067, 0.0
        %vm1100 = vcmp.eq.f32.partialorder %v1068, 0.0
        %vm1101 = vcmp.eq.f32.partialorder %v1069, 0.0
        %vm1102 = vcmp.eq.f32.partialorder %v1070, 0.0
        %vm1103 = vcmp.eq.f32.partialorder %v1071, 0.0
        %vm1104 = vcmp.eq.f32.partialorder %v1072, 0.0
        %vm1105 = vcmp.eq.f32.partialorder %v1073, 0.0
        %vm1106 = vcmp.eq.f32.partialorder %v1074, 0.0
        %vm1107 = vcmp.eq.f32.partialorder %v1075, 0.0
        %vm1108 = vcmp.eq.f32.partialorder %v1076, 0.0
        %vm1109 = vcmp.eq.f32.partialorder %v1077, 0.0
        %vm1110 = vcmp.eq.f32.partialorder %v1078, 0.0
        %vm1111 = vcmp.eq.f32.partialorder %v1079, 0.0
        %vm1112 = vcmp.eq.f32.partialorder %v1080, 0.0
        %vm1113 = vcmp.eq.f32.partialorder %v1081, 0.0
        %vm1114 = vcmp.eq.f32.partialorder %v1082, 0.0
        %vm1115 = vcmp.eq.f32.partialorder %v1083, 0.0
        %v1116 = vadd.f32 %v892, 0.5
        %v1117 = vadd.f32 %v893, 0.5
        %v1118 = vadd.f32 %v894, 0.5
        %v1119 = vadd.f32 %v895, 0.5
        %v1120 = vadd.f32 %v896, 0.5
        %v1121 = vadd.f32 %v897, 0.5
        %v1122 = vadd.f32 %v898, 0.5
        %v1123 = vadd.f32 %v899, 0.5
        %v1124 = vadd.f32 %v900, 0.5
        %v1125 = vadd.f32 %v901, 0.5
        %v1126 = vadd.f32 %v902, 0.5
        %v1127 = vadd.f32 %v903, 0.5
        %v1128 = vadd.f32 %v904, 0.5
        %v1129 = vadd.f32 %v905, 0.5
        %v1130 = vadd.f32 %v906, 0.5
        %v1131 = vadd.f32 %v907, 0.5
        %v1132 = vadd.f32 %v908, 0.5
        %v1133 = vadd.f32 %v909, 0.5
        %v1134 = vadd.f32 %v910, 0.5
        %v1135 = vadd.f32 %v911, 0.5
        %v1136 = vadd.f32 %v912, 0.5
        %v1137 = vadd.f32 %v913, 0.5
        %v1138 = vadd.f32 %v914, 0.5
        %v1139 = vadd.f32 %v915, 0.5
        %v1140 = vadd.f32 %v916, 0.5
        %v1141 = vadd.f32 %v917, 0.5
        %v1142 = vadd.f32 %v918, 0.5
        %v1143 = vadd.f32 %v919, 0.5
        %v1144 = vadd.f32 %v920, 0.5
        %v1145 = vadd.f32 %v921, 0.5
        %v1146 = vadd.f32 %v922, 0.5
        %v1147 = vadd.f32 %v923, 0.5
        %v1148 = vmul.f32 %v1116, 0.5
        %v1149 = vmul.f32 %v1117, 0.5
        %v1150 = vmul.f32 %v1118, 0.5
        %v1151 = vmul.f32 %v1119, 0.5
        %v1152 = vmul.f32 %v1120, 0.5
        %v1153 = vmul.f32 %v1121, 0.5
        %v1154 = vmul.f32 %v1122, 0.5
        %v1155 = vmul.f32 %v1123, 0.5
        %v1156 = vmul.f32 %v1124, 0.5
        %v1157 = vmul.f32 %v1125, 0.5
        %v1158 = vmul.f32 %v1126, 0.5
        %v1159 = vmul.f32 %v1127, 0.5
        %v1160 = vmul.f32 %v1128, 0.5
        %v1161 = vmul.f32 %v1129, 0.5
        %v1162 = vmul.f32 %v1130, 0.5
        %v1163 = vmul.f32 %v1131, 0.5
        %v1164 = vmul.f32 %v1132, 0.5
        %v1165 = vmul.f32 %v1133, 0.5
        %v1166 = vmul.f32 %v1134, 0.5
        %v1167 = vmul.f32 %v1135, 0.5
        %v1168 = vmul.f32 %v1136, 0.5
        %v1169 = vmul.f32 %v1137, 0.5
        %v1170 = vmul.f32 %v1138, 0.5
        %v1171 = vmul.f32 %v1139, 0.5
        %v1172 = vmul.f32 %v1140, 0.5
        %v1173 = vmul.f32 %v1141, 0.5
        %v1174 = vmul.f32 %v1142, 0.5
        %v1175 = vmul.f32 %v1143, 0.5
        %v1176 = vmul.f32 %v1144, 0.5
        %v1177 = vmul.f32 %v1145, 0.5
        %v1178 = vmul.f32 %v1146, 0.5
        %v1179 = vmul.f32 %v1147, 0.5
        %v1180 = vfloor.f32 %v1148
        %v1181 = vfloor.f32 %v1149
        %v1182 = vfloor.f32 %v1150
        %v1183 = vfloor.f32 %v1151
        %v1184 = vfloor.f32 %v1152
        %v1185 = vfloor.f32 %v1153
        %v1186 = vfloor.f32 %v1154
        %v1187 = vfloor.f32 %v1155
        %v1188 = vfloor.f32 %v1156
        %v1189 = vfloor.f32 %v1157
        %v1190 = vfloor.f32 %v1158
        %v1191 = vfloor.f32 %v1159
        %v1192 = vfloor.f32 %v1160
        %v1193 = vfloor.f32 %v1161
        %v1194 = vfloor.f32 %v1162
        %v1195 = vfloor.f32 %v1163
        %v1196 = vfloor.f32 %v1164
        %v1197 = vfloor.f32 %v1165
        %v1198 = vfloor.f32 %v1166
        %v1199 = vfloor.f32 %v1167
        %v1200 = vfloor.f32 %v1168
        %v1201 = vfloor.f32 %v1169
        %v1202 = vfloor.f32 %v1170
        %v1203 = vfloor.f32 %v1171
        %v1204 = vfloor.f32 %v1172
        %v1205 = vfloor.f32 %v1173
        %v1206 = vfloor.f32 %v1174
        %v1207 = vfloor.f32 %v1175
        %v1208 = vfloor.f32 %v1176
        %v1209 = vfloor.f32 %v1177
        %v1210 = vfloor.f32 %v1178
        %v1211 = vfloor.f32 %v1179
        %v1212 = vmul.f32 %v1180, 2.0
        %v1213 = vmul.f32 %v1181, 2.0
        %v1214 = vmul.f32 %v1182, 2.0
        %v1215 = vmul.f32 %v1183, 2.0
        %v1216 = vmul.f32 %v1184, 2.0
        %v1217 = vmul.f32 %v1185, 2.0
        %v1218 = vmul.f32 %v1186, 2.0
        %v1219 = vmul.f32 %v1187, 2.0
        %v1220 = vmul.f32 %v1188, 2.0
        %v1221 = vmul.f32 %v1189, 2.0
        %v1222 = vmul.f32 %v1190, 2.0
        %v1223 = vmul.f32 %v1191, 2.0
        %v1224 = vmul.f32 %v1192, 2.0
        %v1225 = vmul.f32 %v1193, 2.0
        %v1226 = vmul.f32 %v1194, 2.0
        %v1227 = vmul.f32 %v1195, 2.0
        %v1228 = vmul.f32 %v1196, 2.0
        %v1229 = vmul.f32 %v1197, 2.0
        %v1230 = vmul.f32 %v1198, 2.0
        %v1231 = vmul.f32 %v1199, 2.0
        %v1232 = vmul.f32 %v1200, 2.0
        %v1233 = vmul.f32 %v1201, 2.0
        %v1234 = vmul.f32 %v1202, 2.0
        %v1235 = vmul.f32 %v1203, 2.0
        %v1236 = vmul.f32 %v1204, 2.0
        %v1237 = vmul.f32 %v1205, 2.0
        %v1238 = vmul.f32 %v1206, 2.0
        %v1239 = vmul.f32 %v1207, 2.0
        %v1240 = vmul.f32 %v1208, 2.0
        %v1241 = vmul.f32 %v1209, 2.0
        %v1242 = vmul.f32 %v1210, 2.0
        %v1243 = vmul.f32 %v1211, 2.0
        %v1244 = vsub.f32 %v892, %v1212
        %v1245 = vsub.f32 %v893, %v1213
        %v1246 = vsub.f32 %v894, %v1214
        %v1247 = vsub.f32 %v895, %v1215
        %v1248 = vsub.f32 %v896, %v1216
        %v1249 = vsub.f32 %v897, %v1217
        %v1250 = vsub.f32 %v898, %v1218
        %v1251 = vsub.f32 %v899, %v1219
        %v1252 = vsub.f32 %v900, %v1220
        %v1253 = vsub.f32 %v901, %v1221
        %v1254 = vsub.f32 %v902, %v1222
        %v1255 = vsub.f32 %v903, %v1223
        %v1256 = vsub.f32 %v904, %v1224
        %v1257 = vsub.f32 %v905, %v1225
        %v1258 = vsub.f32 %v906, %v1226
        %v1259 = vsub.f32 %v907, %v1227
        %v1260 = vsub.f32 %v908, %v1228
        %v1261 = vsub.f32 %v909, %v1229
        %v1262 = vsub.f32 %v910, %v1230
        %v1263 = vsub.f32 %v911, %v1231
        %v1264 = vsub.f32 %v912, %v1232
        %v1265 = vsub.f32 %v913, %v1233
        %v1266 = vsub.f32 %v914, %v1234
        %v1267 = vsub.f32 %v915, %v1235
        %v1268 = vsub.f32 %v916, %v1236
        %v1269 = vsub.f32 %v917, %v1237
        %v1270 = vsub.f32 %v918, %v1238
        %v1271 = vsub.f32 %v919, %v1239
        %v1272 = vsub.f32 %v920, %v1240
        %v1273 = vsub.f32 %v921, %v1241
        %v1274 = vsub.f32 %v922, %v1242
        %v1275 = vsub.f32 %v923, %v1243
        %vm1276 = vcmp.eq.f32.partialorder %v1244, 0.0
        %vm1277 = vcmp.eq.f32.partialorder %v1245, 0.0
        %vm1278 = vcmp.eq.f32.partialorder %v1246, 0.0
        %vm1279 = vcmp.eq.f32.partialorder %v1247, 0.0
        %vm1280 = vcmp.eq.f32.partialorder %v1248, 0.0
        %vm1281 = vcmp.eq.f32.partialorder %v1249, 0.0
        %vm1282 = vcmp.eq.f32.partialorder %v1250, 0.0
        %vm1283 = vcmp.eq.f32.partialorder %v1251, 0.0
        %vm1284 = vcmp.eq.f32.partialorder %v1252, 0.0
        %vm1285 = vcmp.eq.f32.partialorder %v1253, 0.0
        %vm1286 = vcmp.eq.f32.partialorder %v1254, 0.0
        %vm1287 = vcmp.eq.f32.partialorder %v1255, 0.0
        %vm1288 = vcmp.eq.f32.partialorder %v1256, 0.0
        %vm1289 = vcmp.eq.f32.partialorder %v1257, 0.0
        %vm1290 = vcmp.eq.f32.partialorder %v1258, 0.0
        %vm1291 = vcmp.eq.f32.partialorder %v1259, 0.0
        %vm1292 = vcmp.eq.f32.partialorder %v1260, 0.0
        %vm1293 = vcmp.eq.f32.partialorder %v1261, 0.0
        %vm1294 = vcmp.eq.f32.partialorder %v1262, 0.0
        %vm1295 = vcmp.eq.f32.partialorder %v1263, 0.0
        %vm1296 = vcmp.eq.f32.partialorder %v1264, 0.0
        %vm1297 = vcmp.eq.f32.partialorder %v1265, 0.0
        %vm1298 = vcmp.eq.f32.partialorder %v1266, 0.0
        %vm1299 = vcmp.eq.f32.partialorder %v1267, 0.0
        %vm1300 = vcmp.eq.f32.partialorder %v1268, 0.0
        %vm1301 = vcmp.eq.f32.partialorder %v1269, 0.0
        %vm1302 = vcmp.eq.f32.partialorder %v1270, 0.0
        %vm1303 = vcmp.eq.f32.partialorder %v1271, 0.0
        %vm1304 = vcmp.eq.f32.partialorder %v1272, 0.0
        %vm1305 = vcmp.eq.f32.partialorder %v1273, 0.0
        %vm1306 = vcmp.eq.f32.partialorder %v1274, 0.0
        %vm1307 = vcmp.eq.f32.partialorder %v1275, 0.0
        %vm1308 = vmand %vm1084, %vm1276
        %vm1309 = vmand %vm1085, %vm1277
        %vm1310 = vmand %vm1086, %vm1278
        %vm1311 = vmand %vm1087, %vm1279
        %vm1312 = vmand %vm1088, %vm1280
        %vm1313 = vmand %vm1089, %vm1281
        %vm1314 = vmand %vm1090, %vm1282
        %vm1315 = vmand %vm1091, %vm1283
        %vm1316 = vmand %vm1092, %vm1284
        %vm1317 = vmand %vm1093, %vm1285
        %vm1318 = vmand %vm1094, %vm1286
        %vm1319 = vmand %vm1095, %vm1287
        %vm1320 = vmand %vm1096, %vm1288
        %vm1321 = vmand %vm1097, %vm1289
        %vm1322 = vmand %vm1098, %vm1290
        %vm1323 = vmand %vm1099, %vm1291
        %vm1324 = vmand %vm1100, %vm1292
        %vm1325 = vmand %vm1101, %vm1293
        %vm1326 = vmand %vm1102, %vm1294
        %vm1327 = vmand %vm1103, %vm1295
        %vm1328 = vmand %vm1104, %vm1296
        %vm1329 = vmand %vm1105, %vm1297
        %vm1330 = vmand %vm1106, %vm1298
        %vm1331 = vmand %vm1107, %vm1299
        %vm1332 = vmand %vm1108, %vm1300
        %vm1333 = vmand %vm1109, %vm1301
        %vm1334 = vmand %vm1110, %vm1302
        %vm1335 = vmand %vm1111, %vm1303
        %vm1336 = vmand %vm1112, %vm1304
        %vm1337 = vmand %vm1113, %vm1305
        %vm1338 = vmand %vm1114, %vm1306
        %vm1339 = vmand %vm1115, %vm1307
        %s1340 = smul.u32 %s17, 64
        %s1341 = scvt.s32.f32 %s1340
        %v1342 = vmul.f32 %v988, 8.0
        %v1343 = vmul.f32 %v989, 8.0
        %v1344 = vmul.f32 %v990, 8.0
        %v1345 = vmul.f32 %v991, 8.0
        %v1346 = vmul.f32 %v992, 8.0
        %v1347 = vmul.f32 %v993, 8.0
        %v1348 = vmul.f32 %v994, 8.0
        %v1349 = vmul.f32 %v995, 8.0
        %v1350 = vmul.f32 %v996, 8.0
        %v1351 = vmul.f32 %v997, 8.0
        %v1352 = vmul.f32 %v998, 8.0
        %v1353 = vmul.f32 %v999, 8.0
        %v1354 = vmul.f32 %v1000, 8.0
        %v1355 = vmul.f32 %v1001, 8.0
        %v1356 = vmul.f32 %v1002, 8.0
        %v1357 = vmul.f32 %v1003, 8.0
        %v1358 = vmul.f32 %v1004, 8.0
        %v1359 = vmul.f32 %v1005, 8.0
        %v1360 = vmul.f32 %v1006, 8.0
        %v1361 = vmul.f32 %v1007, 8.0
        %v1362 = vmul.f32 %v1008, 8.0
        %v1363 = vmul.f32 %v1009, 8.0
        %v1364 = vmul.f32 %v1010, 8.0
        %v1365 = vmul.f32 %v1011, 8.0
        %v1366 = vmul.f32 %v1012, 8.0
        %v1367 = vmul.f32 %v1013, 8.0
        %v1368 = vmul.f32 %v1014, 8.0
        %v1369 = vmul.f32 %v1015, 8.0
        %v1370 = vmul.f32 %v1016, 8.0
        %v1371 = vmul.f32 %v1017, 8.0
        %v1372 = vmul.f32 %v1018, 8.0
        %v1373 = vmul.f32 %v1019, 8.0
        %v1374 = vstv %s1341
        %v1375 = vadd.f32 %v1374, %v1342
        %v1376 = vadd.f32 %v1374, %v1343
        %v1377 = vadd.f32 %v1374, %v1344
        %v1378 = vadd.f32 %v1374, %v1345
        %v1379 = vadd.f32 %v1374, %v1346
        %v1380 = vadd.f32 %v1374, %v1347
        %v1381 = vadd.f32 %v1374, %v1348
        %v1382 = vadd.f32 %v1374, %v1349
        %v1383 = vadd.f32 %v1374, %v1350
        %v1384 = vadd.f32 %v1374, %v1351
        %v1385 = vadd.f32 %v1374, %v1352
        %v1386 = vadd.f32 %v1374, %v1353
        %v1387 = vadd.f32 %v1374, %v1354
        %v1388 = vadd.f32 %v1374, %v1355
        %v1389 = vadd.f32 %v1374, %v1356
        %v1390 = vadd.f32 %v1374, %v1357
        %v1391 = vadd.f32 %v1374, %v1358
        %v1392 = vadd.f32 %v1374, %v1359
        %v1393 = vadd.f32 %v1374, %v1360
        %v1394 = vadd.f32 %v1374, %v1361
        %v1395 = vadd.f32 %v1374, %v1362
        %v1396 = vadd.f32 %v1374, %v1363
        %v1397 = vadd.f32 %v1374, %v1364
        %v1398 = vadd.f32 %v1374, %v1365
        %v1399 = vadd.f32 %v1374, %v1366
        %v1400 = vadd.f32 %v1374, %v1367
        %v1401 = vadd.f32 %v1374, %v1368
        %v1402 = vadd.f32 %v1374, %v1369
        %v1403 = vadd.f32 %v1374, %v1370
        %v1404 = vadd.f32 %v1374, %v1371
        %v1405 = vadd.f32 %v1374, %v1372
        %v1406 = vadd.f32 %v1374, %v1373
        %v1407 = vadd.f32 %v1375, %v1180
        %v1408 = vadd.f32 %v1376, %v1181
        %v1409 = vadd.f32 %v1377, %v1182
        %v1410 = vadd.f32 %v1378, %v1183
        %v1411 = vadd.f32 %v1379, %v1184
        %v1412 = vadd.f32 %v1380, %v1185
        %v1413 = vadd.f32 %v1381, %v1186
        %v1414 = vadd.f32 %v1382, %v1187
        %v1415 = vadd.f32 %v1383, %v1188
        %v1416 = vadd.f32 %v1384, %v1189
        %v1417 = vadd.f32 %v1385, %v1190
        %v1418 = vadd.f32 %v1386, %v1191
        %v1419 = vadd.f32 %v1387, %v1192
        %v1420 = vadd.f32 %v1388, %v1193
        %v1421 = vadd.f32 %v1389, %v1194
        %v1422 = vadd.f32 %v1390, %v1195
        %v1423 = vadd.f32 %v1391, %v1196
        %v1424 = vadd.f32 %v1392, %v1197
        %v1425 = vadd.f32 %v1393, %v1198
        %v1426 = vadd.f32 %v1394, %v1199
        %v1427 = vadd.f32 %v1395, %v1200
        %v1428 = vadd.f32 %v1396, %v1201
        %v1429 = vadd.f32 %v1397, %v1202
        %v1430 = vadd.f32 %v1398, %v1203
        %v1431 = vadd.f32 %v1399, %v1204
        %v1432 = vadd.f32 %v1400, %v1205
        %v1433 = vadd.f32 %v1401, %v1206
        %v1434 = vadd.f32 %v1402, %v1207
        %v1435 = vadd.f32 %v1403, %v1208
        %v1436 = vadd.f32 %v1404, %v1209
        %v1437 = vadd.f32 %v1405, %v1210
        %v1438 = vadd.f32 %v1406, %v1211
        %vm1439 = vcmp.eq.f32.partialorder %v218, %v1407
        %vm1440 = vcmp.eq.f32.partialorder %v218, %v1408
        %vm1441 = vcmp.eq.f32.partialorder %v218, %v1409
        %vm1442 = vcmp.eq.f32.partialorder %v218, %v1410
        %vm1443 = vcmp.eq.f32.partialorder %v218, %v1411
        %vm1444 = vcmp.eq.f32.partialorder %v218, %v1412
        %vm1445 = vcmp.eq.f32.partialorder %v218, %v1413
        %vm1446 = vcmp.eq.f32.partialorder %v218, %v1414
        %vm1447 = vcmp.eq.f32.partialorder %v218, %v1415
        %vm1448 = vcmp.eq.f32.partialorder %v218, %v1416
        %vm1449 = vcmp.eq.f32.partialorder %v218, %v1417
        %vm1450 = vcmp.eq.f32.partialorder %v218, %v1418
        %vm1451 = vcmp.eq.f32.partialorder %v218, %v1419
        %vm1452 = vcmp.eq.f32.partialorder %v218, %v1420
        %vm1453 = vcmp.eq.f32.partialorder %v218, %v1421
        %vm1454 = vcmp.eq.f32.partialorder %v218, %v1422
        %vm1455 = vcmp.eq.f32.partialorder %v218, %v1423
        %vm1456 = vcmp.eq.f32.partialorder %v218, %v1424
        %vm1457 = vcmp.eq.f32.partialorder %v218, %v1425
        %vm1458 = vcmp.eq.f32.partialorder %v218, %v1426
        %vm1459 = vcmp.eq.f32.partialorder %v218, %v1427
        %vm1460 = vcmp.eq.f32.partialorder %v218, %v1428
        %vm1461 = vcmp.eq.f32.partialorder %v218, %v1429
        %vm1462 = vcmp.eq.f32.partialorder %v218, %v1430
        %vm1463 = vcmp.eq.f32.partialorder %v218, %v1431
        %vm1464 = vcmp.eq.f32.partialorder %v218, %v1432
        %vm1465 = vcmp.eq.f32.partialorder %v218, %v1433
        %vm1466 = vcmp.eq.f32.partialorder %v218, %v1434
        %vm1467 = vcmp.eq.f32.partialorder %v218, %v1435
        %vm1468 = vcmp.eq.f32.partialorder %v218, %v1436
        %vm1469 = vcmp.eq.f32.partialorder %v218, %v1437
        %vm1470 = vcmp.eq.f32.partialorder %v218, %v1438
        %v1471 = vsel %vm1308, 1, 0
        %v1472 = vsel %vm1309, 1, 0
        %v1473 = vsel %vm1310, 1, 0
        %v1474 = vsel %vm1311, 1, 0
        %v1475 = vsel %vm1312, 1, 0
        %v1476 = vsel %vm1313, 1, 0
        %v1477 = vsel %vm1314, 1, 0
        %v1478 = vsel %vm1315, 1, 0
        %v1479 = vsel %vm1316, 1, 0
        %v1480 = vsel %vm1317, 1, 0
        %v1481 = vsel %vm1318, 1, 0
        %v1482 = vsel %vm1319, 1, 0
        %v1483 = vsel %vm1320, 1, 0
        %v1484 = vsel %vm1321, 1, 0
        %v1485 = vsel %vm1322, 1, 0
        %v1486 = vsel %vm1323, 1, 0
        %v1487 = vsel %vm1324, 1, 0
        %v1488 = vsel %vm1325, 1, 0
        %v1489 = vsel %vm1326, 1, 0
        %v1490 = vsel %vm1327, 1, 0
        %v1491 = vsel %vm1328, 1, 0
        %v1492 = vsel %vm1329, 1, 0
        %v1493 = vsel %vm1330, 1, 0
        %v1494 = vsel %vm1331, 1, 0
        %v1495 = vsel %vm1332, 1, 0
        %v1496 = vsel %vm1333, 1, 0
        %v1497 = vsel %vm1334, 1, 0
        %v1498 = vsel %vm1335, 1, 0
        %v1499 = vsel %vm1336, 1, 0
        %v1500 = vsel %vm1337, 1, 0
        %v1501 = vsel %vm1338, 1, 0
        %v1502 = vsel %vm1339, 1, 0
        %vm1503 = vcmp.eq.s32.totalorder %v1471, 1
        %vm1504 = vcmp.eq.s32.totalorder %v1472, 1
        %vm1505 = vcmp.eq.s32.totalorder %v1473, 1
        %vm1506 = vcmp.eq.s32.totalorder %v1474, 1
        %vm1507 = vcmp.eq.s32.totalorder %v1475, 1
        %vm1508 = vcmp.eq.s32.totalorder %v1476, 1
        %vm1509 = vcmp.eq.s32.totalorder %v1477, 1
        %vm1510 = vcmp.eq.s32.totalorder %v1478, 1
        %vm1511 = vcmp.eq.s32.totalorder %v1479, 1
        %vm1512 = vcmp.eq.s32.totalorder %v1480, 1
        %vm1513 = vcmp.eq.s32.totalorder %v1481, 1
        %vm1514 = vcmp.eq.s32.totalorder %v1482, 1
        %vm1515 = vcmp.eq.s32.totalorder %v1483, 1
        %vm1516 = vcmp.eq.s32.totalorder %v1484, 1
        %vm1517 = vcmp.eq.s32.totalorder %v1485, 1
        %vm1518 = vcmp.eq.s32.totalorder %v1486, 1
        %vm1519 = vcmp.eq.s32.totalorder %v1487, 1
        %vm1520 = vcmp.eq.s32.totalorder %v1488, 1
        %vm1521 = vcmp.eq.s32.totalorder %v1489, 1
        %vm1522 = vcmp.eq.s32.totalorder %v1490, 1
        %vm1523 = vcmp.eq.s32.totalorder %v1491, 1
        %vm1524 = vcmp.eq.s32.totalorder %v1492, 1
        %vm1525 = vcmp.eq.s32.totalorder %v1493, 1
        %vm1526 = vcmp.eq.s32.totalorder %v1494, 1
        %vm1527 = vcmp.eq.s32.totalorder %v1495, 1
        %vm1528 = vcmp.eq.s32.totalorder %v1496, 1
        %vm1529 = vcmp.eq.s32.totalorder %v1497, 1
        %vm1530 = vcmp.eq.s32.totalorder %v1498, 1
        %vm1531 = vcmp.eq.s32.totalorder %v1499, 1
        %vm1532 = vcmp.eq.s32.totalorder %v1500, 1
        %vm1533 = vcmp.eq.s32.totalorder %v1501, 1
        %vm1534 = vcmp.eq.s32.totalorder %v1502, 1
        %vm1535 = vmand %vm1503, %vm1439
        %vm1536 = vmand %vm1504, %vm1440
        %vm1537 = vmand %vm1505, %vm1441
        %vm1538 = vmand %vm1506, %vm1442
        %vm1539 = vmand %vm1507, %vm1443
        %vm1540 = vmand %vm1508, %vm1444
        %vm1541 = vmand %vm1509, %vm1445
        %vm1542 = vmand %vm1510, %vm1446
        %vm1543 = vmand %vm1511, %vm1447
        %vm1544 = vmand %vm1512, %vm1448
        %vm1545 = vmand %vm1513, %vm1449
        %vm1546 = vmand %vm1514, %vm1450
        %vm1547 = vmand %vm1515, %vm1451
        %vm1548 = vmand %vm1516, %vm1452
        %vm1549 = vmand %vm1517, %vm1453
        %vm1550 = vmand %vm1518, %vm1454
        %vm1551 = vmand %vm1519, %vm1455
        %vm1552 = vmand %vm1520, %vm1456
        %vm1553 = vmand %vm1521, %vm1457
        %vm1554 = vmand %vm1522, %vm1458
        %vm1555 = vmand %vm1523, %vm1459
        %vm1556 = vmand %vm1524, %vm1460
        %vm1557 = vmand %vm1525, %vm1461
        %vm1558 = vmand %vm1526, %vm1462
        %vm1559 = vmand %vm1527, %vm1463
        %vm1560 = vmand %vm1528, %vm1464
        %vm1561 = vmand %vm1529, %vm1465
        %vm1562 = vmand %vm1530, %vm1466
        %vm1563 = vmand %vm1531, %vm1467
        %vm1564 = vmand %vm1532, %vm1468
        %vm1565 = vmand %vm1533, %vm1469
        %vm1566 = vmand %vm1534, %vm1470
        %v1567 = vsel %vm1535, 1.0, 0.0
        %v1568 = vsel %vm1536, 1.0, 0.0
        %v1569 = vsel %vm1537, 1.0, 0.0
        %v1570 = vsel %vm1538, 1.0, 0.0
        %v1571 = vsel %vm1539, 1.0, 0.0
        %v1572 = vsel %vm1540, 1.0, 0.0
        %v1573 = vsel %vm1541, 1.0, 0.0
        %v1574 = vsel %vm1542, 1.0, 0.0
        %v1575 = vsel %vm1543, 1.0, 0.0
        %v1576 = vsel %vm1544, 1.0, 0.0
        %v1577 = vsel %vm1545, 1.0, 0.0
        %v1578 = vsel %vm1546, 1.0, 0.0
        %v1579 = vsel %vm1547, 1.0, 0.0
        %v1580 = vsel %vm1548, 1.0, 0.0
        %v1581 = vsel %vm1549, 1.0, 0.0
        %v1582 = vsel %vm1550, 1.0, 0.0
        %v1583 = vsel %vm1551, 1.0, 0.0
        %v1584 = vsel %vm1552, 1.0, 0.0
        %v1585 = vsel %vm1553, 1.0, 0.0
        %v1586 = vsel %vm1554, 1.0, 0.0
        %v1587 = vsel %vm1555, 1.0, 0.0
        %v1588 = vsel %vm1556, 1.0, 0.0
        %v1589 = vsel %vm1557, 1.0, 0.0
        %v1590 = vsel %vm1558, 1.0, 0.0
        %v1591 = vsel %vm1559, 1.0, 0.0
        %v1592 = vsel %vm1560, 1.0, 0.0
        %v1593 = vsel %vm1561, 1.0, 0.0
        %v1594 = vsel %vm1562, 1.0, 0.0
        %v1595 = vsel %vm1563, 1.0, 0.0
        %v1596 = vsel %vm1564, 1.0, 0.0
        %v1597 = vsel %vm1565, 1.0, 0.0
        %v1598 = vsel %vm1566, 1.0, 0.0
        %1599 = vmatprep.subr.mxu0 0.0
        %1600 = vmatpush1.msra.mxu0 %v1582
        %1601 = vmatprep.subr.mxu0 0.0
        %1602 = vmatpush1.msra.mxu0 %v1581
        %1603 = vmatprep.subr.mxu0 0.0
        %1604 = vmatpush1.msra.mxu0 %v1580
        %1605 = vmatprep.subr.mxu0 0.0
        %1606 = vmatpush1.msra.mxu0 %v1579
        %1607 = vmatprep.subr.mxu0 0.0
        %1608 = vmatpush1.msra.mxu0 %v1578
        %1609 = vmatprep.subr.mxu0 0.0
        %1610 = vmatpush1.msra.mxu0 %v1577
        %1611 = vmatprep.subr.mxu0 0.0
        %1612 = vmatpush1.msra.mxu0 %v1576
        %1613 = vmatprep.subr.mxu0 0.0
        %1614 = vmatpush1.msra.mxu0 %v1575
        %1615 = vmatprep.subr.mxu0 0.0
        %1616 = vmatpush1.msra.mxu0 %v1574
        %1617 = vmatprep.subr.mxu0 0.0
        %1618 = vmatpush1.msra.mxu0 %v1573
        %1619 = vmatprep.subr.mxu0 0.0
        %1620 = vmatpush1.msra.mxu0 %v1572
        %1621 = vmatprep.subr.mxu0 0.0
        %1622 = vmatpush1.msra.mxu0 %v1571
        %1623 = vmatprep.subr.mxu0 0.0
        %1624 = vmatpush1.msra.mxu0 %v1570
        %1625 = vmatprep.subr.mxu0 0.0
        %1626 = vmatpush1.msra.mxu0 %v1569
        %1627 = vmatprep.subr.mxu0 0.0
        %1628 = vmatpush1.msra.mxu0 %v1568
        %1629 = vmatprep.subr.mxu0 0.0
        %1630 = vmatpush1.msra.mxu0 %v1567
        %1631 = vmatprep.subr.mxu0 0.0
        %1632 = vmatpush2.msra.mxu0 %v1598
        %1633 = vmatprep.subr.mxu0 0.0
        %1634 = vmatpush2.msra.mxu0 %v1597
        %1635 = vmatprep.subr.mxu0 0.0
        %1636 = vmatpush2.msra.mxu0 %v1596
        %1637 = vmatprep.subr.mxu0 0.0
        %1638 = vmatpush2.msra.mxu0 %v1595
        %1639 = vmatprep.subr.mxu0 0.0
        %1640 = vmatpush2.msra.mxu0 %v1594
        %1641 = vmatprep.subr.mxu0 0.0
        %1642 = vmatpush2.msra.mxu0 %v1593
        %1643 = vmatprep.subr.mxu0 0.0
        %1644 = vmatpush2.msra.mxu0 %v1592
        %1645 = vmatprep.subr.mxu0 0.0
        %1646 = vmatpush2.msra.mxu0 %v1591
        %1647 = vmatprep.subr.mxu0 0.0
        %1648 = vmatpush2.msra.mxu0 %v1590
        %1649 = vmatprep.subr.mxu0 0.0
        %1650 = vmatpush2.msra.mxu0 %v1589
        %1651 = vmatprep.subr.mxu0 0.0
        %1652 = vmatpush2.msra.mxu0 %v1588
        %1653 = vmatprep.subr.mxu0 0.0
        %1654 = vmatpush2.msra.mxu0 %v1587
        %1655 = vmatprep.subr.mxu0 0.0
        %1656 = vmatpush2.msra.mxu0 %v1586
        %1657 = vmatprep.subr.mxu0 0.0
        %1658 = vmatpush2.msra.mxu0 %v1585
        %1659 = vmatprep.subr.mxu0 0.0
        %1660 = vmatpush2.msra.mxu0 %v1584
        %1661 = vmatprep.subr.mxu0 0.0
        %1662 = vmatpush2.msra.mxu0 %v1583
        %1663 = vmatprep.mubr.f32.mxu0 %v698
        %1664 = vmatmul.mubr.f32.gmra.mxu0 %v697
        %v1665 = vpop.f32.mrf.mxu0
        %v1666 = vadd.f32 0.0, %v1665
        %v1667 = vpop.f32.mrf.mxu0
        %1668 = vdwg.mxu0
        %v1669 = vmax.f32 %v1666, 0.0
        %p1670 = scmp.eq.s32.totalorder %s17, 0
        // Predicated region
        $region41: #{tpu_custom_call.1} parent=39 // pred_check
          %p1671 = pneg %p1670
        $region42: #{tpu_custom_call.1} parent=39 // pred_check_branch
          %1673 = sbr.rel (%p1671) target = $region44
        $region43: #{tpu_custom_call.1} parent=39 // pred_region
          %1674 = vst [vmem:[#allocation7] sm:$0xff] 0.0
          %1675 = vst.msk [vmem:[#allocation5] sm:$0xff] %vm368, 0.0
          %1676 = vst.msk [vmem:[#allocation6] sm:$0xff] %vm368, 0.0
        $region44: #{tpu_custom_call.1} parent=39 // pred_fallthru
          _
        %v1677 = vld [vmem:[#allocation7] sm:$0xff]
        %v1678 = vadd.f32 %v1677, %v1669
        %1679 = vst [vmem:[#allocation7] sm:$0xff] %v1678
        %v1680 = vld [vmem:[#allocation5] sm:$0xff]
        %1681 = vadd.xlane.f32.xlu0 %v1669
        %v1682 = vpop.xlane.xlu0 %1681
        %v1683 = vadd.f32 %v1680, %v1682
        %1684 = vst.msk [vmem:[#allocation5] sm:$0xff] %vm368, %v1683
        %v1685 = vld [vmem:[#allocation6] sm:$0xff]
        %v1686 = vmul.f32 %v1669, %v1669
        %1687 = vadd.xlane.f32.xlu0 %v1686
        %v1688 = vpop.xlane.xlu0 %1687
        %v1689 = vadd.f32 %v1685, %v1688
        %1690 = vst.msk [vmem:[#allocation6] sm:$0xff] %vm368, %v1689
        %p1691 = scmp.eq.s32.totalorder %s17, 1
        // Predicated region
        $region45: #{tpu_custom_call.1} parent=39 // pred_check
          %p1692 = pneg %p1691
        $region46: #{tpu_custom_call.1} parent=39 // pred_check_branch
          %1694 = sbr.rel (%p1692) target = $region48
        $region47: #{tpu_custom_call.1} parent=39 // pred_region
          %v1695 = vld [vmem:[#allocation5] sm:$0xff]
          %v1696 = vmul.f32 %v1695, 0.0078125
          %v1697 = vld [vmem:[#allocation6] sm:$0xff]
          %v1698 = vmul.f32 %v1697, 0.0078125
          %v1699 = vmul.f32 %v1696, %v1696
          %v1700 = vsub.f32 %v1698, %v1699
          %v1701 = vld [vmem:[%s3] sm:$0xff]
          %v1702 = vadd.f32 %v1700, 1e-05
          %v1703 = vrsqrt.pop %v1702
          %v1704 = vmul.f32 %v1701, %v1703
          %v1705 = vld [vmem:[%s4] sm:$0xff]
          %v1706 = vmul.f32 %v1696, %v1704
          %v1707 = vsub.f32 %v1705, %v1706
          %v1708 = vld [vmem:[#allocation7] sm:$0xff]
          %1710 = vset.pattern.permute.xlu0 0
          %1711 = vperm.xlu0 %1710, %v1704
          %v1712 = vpop.permute.xlu0 %1711
          %v1714 = vmul.f32 %v1708, %v1712
          %1716 = vset.pattern.permute.xlu0 0
          %1717 = vperm.xlu0 %1716, %v1707
          %v1718 = vpop.permute.xlu0 %1717
          %v1720 = vadd.f32 %v1714, %v1718
          %1721 = vst [vmem:[#allocation7] sm:$0xff] %v1720
        $region48: #{tpu_custom_call.1} parent=39 // pred_fallthru
          _
        // Predicated region
        $region49: #{tpu_custom_call.1} parent=39 // pred_check
          %p1722 = pneg %p140
        $region50: #{tpu_custom_call.1} parent=39 // pred_check_branch
          %1724 = sbr.rel (%p1722) target = $region52
        $region51: #{tpu_custom_call.1} parent=39 // pred_region
          %s1726 = ssub.s32 128, 128
          %1727 = vsyncadd [#allocation8], %s1726
          %s1729 = sshll.u32 [#allocation7], 4
          %s1730 = int_to_ptr.vmem [resolvable:$true] %s1729
          %1732 = dma.vmem_to_hbm [thread:$0]  %s1730, 128, %s5, [#allocation8]
        $region52: #{tpu_custom_call.1} parent=39 // pred_fallthru
          _
        // Predicated region
        $region53: #{tpu_custom_call.1} parent=39 // pred_check
          %p1733 = pneg %p140
        $region54: #{tpu_custom_call.1} parent=39 // pred_check_branch
          %1735 = sbr.rel (%p1733) target = $region56
        $region55: #{tpu_custom_call.1} parent=39 // pred_region
          %1736 = dma.done [#allocation8], 128
        $region56: #{tpu_custom_call.1} parent=39 // pred_fallthru
          _
      $region40: #{tpu_custom_call.1} parent=5 // pred_fallthru
        _
      %p1737 = scmp.le.s32.totalorder 2, %s12
      // Predicated region
      $region57: #{tpu_custom_call.1} parent=5 // pred_check
        %p1738 = pneg %p1737
      $region58: #{tpu_custom_call.1} parent=5 // pred_check_branch
        %1740 = sbr.rel (%p1738) target = $region60
      $region59: #{tpu_custom_call.1} parent=5 // pred_region
        %s1741 = ssub.s32 %s12, 2
      $region60: #{tpu_custom_call.1} parent=5 // pred_fallthru
        _
    $region6: #{tpu_custom_call.1} parent=1 // loop_footer
      %s16 = sadd.s32 1, %s12
    $region7: #{tpu_custom_call.1} parent=1 // loop_footer_branch
      %11 = sbr.rel target = $region3
    $region8: #{tpu_custom_call.1} parent=1 // loop_exit
      _
    %1742 = vsyncpa [#allocation8], 1
    %s1743 = scalar_lea.sflag [#allocation8], 1
    %1744 = vsyncpa %s1743, 1

</llo_original>
